<compile_context>
chip_gen: v7x
topology: tpu7x:2x2x1
jax: 0.10.0
libtpu: 0.0.40
codegen_flags: <defaults>
</compile_context>

<pallas_src>
import functools

import jax
import jax.numpy as jnp
from jax.experimental import pallas as pl
from jax.experimental.pallas import tpu as pltpu


def _round_up(n, m):
    return ((n + m - 1) // m) * m


def _leaky_relu(x, slope=0.01):
    return jnp.where(x > 0, x, slope * x)


def _mlp_kernel(x_ref, w1_ref, w2_ref, w3_ref, w4_ref, b_ref, o_ref):
    # Static sizes from the (full-array) weight blocks.
    latent = w3_ref.shape[1]
    num_wps = w4_ref.shape[1]

    b1 = b_ref[0:1, :512]        # (1, 512)  f32
    b2 = b_ref[1:2, :256]        # (1, 256)  f32
    b3 = b_ref[2:3, :latent]     # (1, L)    f32
    b4 = b_ref[3:4, :num_wps]    # (1, 3)    f32

    x = x_ref[...]               # (TB, 1024) f32

    # projector: Linear(1024(=padded 1000), 512) + LeakyReLU   (bf16 MXU, f32 accum)
    h = jnp.dot(x.astype(jnp.bfloat16), w1_ref[...],
                preferred_element_type=jnp.float32)
    h = _leaky_relu(h + b1)

    # projector: Linear(512, 256)
    h = jnp.dot(h.astype(jnp.bfloat16), w2_ref[...],
                preferred_element_type=jnp.float32) + b2

    # dynamic_predictor (DinMod stand-in): Linear(256, L) -> LeakyReLU -> Linear(L, 3)
    h = jnp.dot(h.astype(jnp.bfloat16), w3_ref[...],
                preferred_element_type=jnp.float32)
    h = _leaky_relu(h + b3)
    out = jnp.dot(h.astype(jnp.bfloat16), w4_ref[...],
                  preferred_element_type=jnp.float32) + b4

    o_ref[...] = out.astype(o_ref.dtype)


def model_forward(x, params, *, block_b=512):
    """x: [B, 1000] float32; params: dict of f32 weights/biases (row-major, x @ W + b)."""
    B, K = x.shape
    assert K == 1000, K
    Kp = 1024                                   # pad contraction dim to a lane multiple
    latent = params["w3"].shape[1]
    num_wps = params["w4"].shape[1]

    # Batch tiling: TB multiple of 8, capped; pad batch to a multiple of TB.
    TB = min(block_b, _round_up(B, 8))
    Bp = _round_up(B, TB)
    grid = (Bp // TB,)

    # Host-side padding / packing (zeros in padded K contribute nothing to the dot).
    xp = jnp.zeros((Bp, Kp), jnp.float32).at[:B, :K].set(x)
    w1 = jnp.zeros((Kp, 512), jnp.float32).at[:K, :].set(params["w1"]).astype(jnp.bfloat16)
    w2 = params["w2"].astype(jnp.bfloat16)
    w3 = params["w3"].astype(jnp.bfloat16)
    w4 = params["w4"].astype(jnp.bfloat16)

    bw = max(512, latent, num_wps)
    bias = jnp.zeros((4, bw), jnp.float32)
    bias = bias.at[0, :512].set(params["b1"].reshape(-1))
    bias = bias.at[1, :256].set(params["b2"].reshape(-1))
    bias = bias.at[2, :latent].set(params["b3"].reshape(-1))
    bias = bias.at[3, :num_wps].set(params["b4"].reshape(-1))

    # Advisory cost estimate for the XLA scheduler.
    flops = 2 * Bp * (Kp * 512 + 512 * 256 + 256 * latent + latent * num_wps)
    bytes_accessed = (xp.size * 4 + w1.size * 2 + w2.size * 2 + w3.size * 2
                      + w4.size * 2 + bias.size * 4 + Bp * num_wps * 4)

    const = lambda i: (0, 0)                    # weights/biases resident across steps
    out_padded = pl.pallas_call(
        _mlp_kernel,
        out_shape=jax.ShapeDtypeStruct((Bp, num_wps), jnp.float32),
        grid=grid,
        in_specs=[
            pl.BlockSpec((TB, Kp), lambda i: (i, 0)),       # x tile (pipelined)
            pl.BlockSpec((Kp, 512), const),                 # w1 (bf16)
            pl.BlockSpec((512, 256), const),                # w2 (bf16)
            pl.BlockSpec((256, latent), const),             # w3 (bf16)
            pl.BlockSpec((latent, num_wps), const),         # w4 (bf16)
            pl.BlockSpec((4, bw), const),                   # packed biases (f32)
        ],
        out_specs=pl.BlockSpec((TB, num_wps), lambda i: (i, 0)),
        compiler_params=pltpu.CompilerParams(
            dimension_semantics=("parallel",)),
        cost_estimate=pl.CostEstimate(
            flops=flops, transcendentals=0, bytes_accessed=bytes_accessed),
    )(xp, w1, w2, w3, w4, bias)

    return out_padded[:B]                       # drop padded (garbage-but-harmless) rows


def init_params(key, latent_features=64, num_wps=3):
    ks = jax.random.split(key, 8)

    def lin(kw, kb, fan_in, fan_out):
        # Mirrors nn.Linear's uniform(-1/sqrt(fan_in), 1/sqrt(fan_in)) init.
        bound = 1.0 / jnp.sqrt(fan_in)
        w = jax.random.uniform(kw, (fan_in, fan_out), jnp.float32, -bound, bound)
        b = jax.random.uniform(kb, (1, fan_out), jnp.float32, -bound, bound)
        return w, b

    w1, b1 = lin(ks[0], ks[1], 1000, 512)
    w2, b2 = lin(ks[2], ks[3], 512, 256)
    w3, b3 = lin(ks[4], ks[5], 256, latent_features)
    w4, b4 = lin(ks[6], ks[7], latent_features, num_wps)
    return dict(w1=w1, b1=b1, w2=w2, b2=b2, w3=w3, b3=b3, w4=w4, b4=b4)


def reference_forward(x, p):
    """Pure-JAX reference with the same bf16-matmul / f32-accumulate numerics."""
    def dot_bf16(a, w):
        return jnp.dot(a.astype(jnp.bfloat16), w.astype(jnp.bfloat16),
                       preferred_element_type=jnp.float32)

    h = _leaky_relu(dot_bf16(x, p["w1"]) + p["b1"])
    h = dot_bf16(h, p["w2"]) + p["b2"]
    h = _leaky_relu(dot_bf16(h, p["w3"]) + p["b3"])
    return dot_bf16(h, p["w4"]) + p["b4"]


if __name__ == "__main__":
    key = jax.random.PRNGKey(0)
    k_x, k_p = jax.random.split(key)
    B = 8
    x = jax.random.normal(k_x, (B, 1000), jnp.float32)
    params = init_params(k_p, latent_features=64, num_wps=3)

    out = model_forward(x, params)
    out = jax.block_until_ready(out)

    ref = reference_forward(x, params)
    assert out.shape == (B, 3), out.shape
    assert jnp.allclose(out, ref, atol=1e-3, rtol=1e-3), "mismatch vs JAX reference"
    print("KERNEL_OK")
</pallas_src>

<mosaic_0001>
module attributes {stable_mosaic.version = 11 : i64} {
  func.func @_mlp_kernel(%arg0: i32, %arg1: memref<8x1024xf32, #tpu.memory_space<vmem>>, %arg2: memref<1024x512xbf16, #tpu.memory_space<vmem>>, %arg3: memref<512x256xbf16, #tpu.memory_space<vmem>>, %arg4: memref<256x64xbf16, #tpu.memory_space<vmem>>, %arg5: memref<64x3xbf16, #tpu.memory_space<vmem>>, %arg6: memref<4x512xf32, #tpu.memory_space<vmem>>, %arg7: memref<8x3xf32, #tpu.memory_space<vmem>>) attributes {dimension_semantics = [#tpu.dimension_semantics<parallel>], iteration_bounds = array<i64: 1>, scalar_prefetch = 0 : i64, scratch_operands = 0 : i64, tpu.core_type = #tpu.core_type<tc>, window_params = [{transform_indices = @transform_0, window_bounds = array<i64: 8, 1024>}, {pipeline_mode = #tpu.pipeline_mode<synchronous>, transform_indices = @transform_1, window_bounds = array<i64: 1024, 512>}, {pipeline_mode = #tpu.pipeline_mode<synchronous>, transform_indices = @transform_2, window_bounds = array<i64: 512, 256>}, {pipeline_mode = #tpu.pipeline_mode<synchronous>, transform_indices = @transform_3, window_bounds = array<i64: 256, 64>}, {pipeline_mode = #tpu.pipeline_mode<synchronous>, transform_indices = @transform_4, window_bounds = array<i64: 64, 3>}, {pipeline_mode = #tpu.pipeline_mode<synchronous>, transform_indices = @transform_5, window_bounds = array<i64: 4, 512>}, {transform_indices = @transform_6, window_bounds = array<i64: 8, 3>}]} {
    %c0 = arith.constant 0 : index
    %c0_0 = arith.constant 0 : index
    %0 = vector.load %arg6[%c0, %c0_0] : memref<4x512xf32, #tpu.memory_space<vmem>>, vector<1x512xf32>
    %c1 = arith.constant 1 : index
    %c0_1 = arith.constant 0 : index
    %1 = vector.load %arg6[%c1, %c0_1] : memref<4x512xf32, #tpu.memory_space<vmem>>, vector<1x256xf32>
    %c2 = arith.constant 2 : index
    %c0_2 = arith.constant 0 : index
    %2 = vector.load %arg6[%c2, %c0_2] : memref<4x512xf32, #tpu.memory_space<vmem>>, vector<1x64xf32>
    %c3 = arith.constant 3 : index
    %c0_3 = arith.constant 0 : index
    %3 = vector.load %arg6[%c3, %c0_3] : memref<4x512xf32, #tpu.memory_space<vmem>>, vector<1x3xf32>
    %c0_4 = arith.constant 0 : index
    %c0_5 = arith.constant 0 : index
    %4 = vector.load %arg1[%c0_4, %c0_5] : memref<8x1024xf32, #tpu.memory_space<vmem>>, vector<8x1024xf32>
    %5 = arith.truncf %4 : vector<8x1024xf32> to vector<8x1024xbf16>
    %c0_6 = arith.constant 0 : index
    %c0_7 = arith.constant 0 : index
    %6 = vector.load %arg2[%c0_6, %c0_7] : memref<1024x512xbf16, #tpu.memory_space<vmem>>, vector<1024x512xbf16>
    %cst = arith.constant dense<0.000000e+00> : vector<8x512xf32>
    %7 = tpu.matmul %5, %6, %cst {dimension_numbers = #tpu.dot_dimension_numbers<[1], [0], [0], [1], [0, 0, 1, 1], [], []>} : vector<8x1024xbf16>, vector<1024x512xbf16>, vector<8x512xf32> -> vector<8x512xf32>
    %8 = vector.broadcast %0 : vector<1x512xf32> to vector<8x512xf32>
    %9 = arith.addf %7, %8 : vector<8x512xf32>
    %cst_8 = arith.constant 0.000000e+00 : f32
    %10 = vector.broadcast %cst_8 : f32 to vector<8x512xf32>
    %11 = arith.cmpf ogt, %9, %10 : vector<8x512xf32>
    %cst_9 = arith.constant 0.00999999977 : f32
    %12 = vector.broadcast %cst_9 : f32 to vector<8x512xf32>
    %13 = arith.mulf %12, %9 : vector<8x512xf32>
    %14 = arith.select %11, %9, %13 : vector<8x512xi1>, vector<8x512xf32>
    %15 = arith.truncf %14 : vector<8x512xf32> to vector<8x512xbf16>
    %c0_10 = arith.constant 0 : index
    %c0_11 = arith.constant 0 : index
    %16 = vector.load %arg3[%c0_10, %c0_11] : memref<512x256xbf16, #tpu.memory_space<vmem>>, vector<512x256xbf16>
    %cst_12 = arith.constant dense<0.000000e+00> : vector<8x256xf32>
    %17 = tpu.matmul %15, %16, %cst_12 {dimension_numbers = #tpu.dot_dimension_numbers<[1], [0], [0], [1], [0, 0, 1, 1], [], []>} : vector<8x512xbf16>, vector<512x256xbf16>, vector<8x256xf32> -> vector<8x256xf32>
    %18 = vector.broadcast %1 : vector<1x256xf32> to vector<8x256xf32>
    %19 = arith.addf %17, %18 : vector<8x256xf32>
    %20 = arith.truncf %19 : vector<8x256xf32> to vector<8x256xbf16>
    %c0_13 = arith.constant 0 : index
    %c0_14 = arith.constant 0 : index
    %21 = vector.load %arg4[%c0_13, %c0_14] : memref<256x64xbf16, #tpu.memory_space<vmem>>, vector<256x64xbf16>
    %cst_15 = arith.constant dense<0.000000e+00> : vector<8x64xf32>
    %22 = tpu.matmul %20, %21, %cst_15 {dimension_numbers = #tpu.dot_dimension_numbers<[1], [0], [0], [1], [0, 0, 1, 1], [], []>} : vector<8x256xbf16>, vector<256x64xbf16>, vector<8x64xf32> -> vector<8x64xf32>
    %23 = vector.broadcast %2 : vector<1x64xf32> to vector<8x64xf32>
    %24 = arith.addf %22, %23 : vector<8x64xf32>
    %cst_16 = arith.constant 0.000000e+00 : f32
    %25 = vector.broadcast %cst_16 : f32 to vector<8x64xf32>
    %26 = arith.cmpf ogt, %24, %25 : vector<8x64xf32>
    %cst_17 = arith.constant 0.00999999977 : f32
    %27 = vector.broadcast %cst_17 : f32 to vector<8x64xf32>
    %28 = arith.mulf %27, %24 : vector<8x64xf32>
    %29 = arith.select %26, %24, %28 : vector<8x64xi1>, vector<8x64xf32>
    %30 = arith.truncf %29 : vector<8x64xf32> to vector<8x64xbf16>
    %c0_18 = arith.constant 0 : index
    %c0_19 = arith.constant 0 : index
    %31 = vector.load %arg5[%c0_18, %c0_19] : memref<64x3xbf16, #tpu.memory_space<vmem>>, vector<64x3xbf16>
    %cst_20 = arith.constant dense<0.000000e+00> : vector<8x3xf32>
    %32 = tpu.matmul %30, %31, %cst_20 {dimension_numbers = #tpu.dot_dimension_numbers<[1], [0], [0], [1], [0, 0, 1, 1], [], []>} : vector<8x64xbf16>, vector<64x3xbf16>, vector<8x3xf32> -> vector<8x3xf32>
    %33 = vector.broadcast %3 : vector<1x3xf32> to vector<8x3xf32>
    %34 = arith.addf %32, %33 : vector<8x3xf32>
    %c0_21 = arith.constant 0 : index
    %c0_22 = arith.constant 0 : index
    %35 = vector.load %arg7[%c0_21, %c0_22] : memref<8x3xf32, #tpu.memory_space<vmem>>, vector<8x3xf32>
    tpu.vector_store %arg7[%c0_21, %c0_22], %34 {strides = array<i32>} : memref<8x3xf32, #tpu.memory_space<vmem>>, vector<8x3xf32>,
    return
  }
  func.func @transform_0(%arg0: i32) -> (i32, i32) {
    %c0_i32 = arith.constant 0 : i32
    %c0_i32_0 = arith.constant 0 : i32
    return %arg0, %c0_i32 : i32, i32
  }
  func.func @transform_1(%arg0: i32) -> (i32, i32) {
    %c0_i32 = arith.constant 0 : i32
    %c0_i32_0 = arith.constant 0 : i32
    %c0_i32_1 = arith.constant 0 : i32
    return %c0_i32, %c0_i32_0 : i32, i32
  }
  func.func @transform_2(%arg0: i32) -> (i32, i32) {
    %c0_i32 = arith.constant 0 : i32
    %c0_i32_0 = arith.constant 0 : i32
    %c0_i32_1 = arith.constant 0 : i32
    return %c0_i32, %c0_i32_0 : i32, i32
  }
  func.func @transform_3(%arg0: i32) -> (i32, i32) {
    %c0_i32 = arith.constant 0 : i32
    %c0_i32_0 = arith.constant 0 : i32
    %c0_i32_1 = arith.constant 0 : i32
    return %c0_i32, %c0_i32_0 : i32, i32
  }
  func.func @transform_4(%arg0: i32) -> (i32, i32) {
    %c0_i32 = arith.constant 0 : i32
    %c0_i32_0 = arith.constant 0 : i32
    %c0_i32_1 = arith.constant 0 : i32
    return %c0_i32, %c0_i32_0 : i32, i32
  }
  func.func @transform_5(%arg0: i32) -> (i32, i32) {
    %c0_i32 = arith.constant 0 : i32
    %c0_i32_0 = arith.constant 0 : i32
    %c0_i32_1 = arith.constant 0 : i32
    return %c0_i32, %c0_i32_0 : i32, i32
  }
  func.func @transform_6(%arg0: i32) -> (i32, i32) {
    %c0_i32 = arith.constant 0 : i32
    %c0_i32_0 = arith.constant 0 : i32
    return %arg0, %c0_i32 : i32, i32
  }
}

</mosaic_0001>

<llo_original>
// kernel: tpu_custom_call.1
$region0: #{tpu_custom_call.1}
  #allocation0 [shape = 'u32[]', space=smem, size = 0x4, offset = 0x4, fixed_abs, tag = 'smem constant byte address 0x4 - core index']
  #allocation1 [shape = 'u32[144,128]{1,0:T(1,128)}', space=vmem, size = 0x12000, scoped, tag = 'internal scratch']
  %s0 = inlined_call_operand.vmem [shape: f32[8,1024], index: 0, kind: input, shape index: {}]
  %s1 = inlined_call_operand.hbm [shape: bf16[1024,512], index: 1, kind: input, shape index: {}]
  %s2 = inlined_call_operand.hbm [shape: bf16[512,256], index: 2, kind: input, shape index: {}]
  %s3 = inlined_call_operand.vmem [shape: bf16[256,64], index: 3, kind: input, shape index: {}]
  %s4 = inlined_call_operand.vmem [shape: bf16[64,3], index: 4, kind: input, shape index: {}]
  %s5 = inlined_call_operand.vmem [shape: f32[4,512], index: 5, kind: input, shape index: {}]
  %s6 = inlined_call_operand.vmem [shape: f32[8,3], index: 6, kind: output, shape index: {}]
  %s7 = sld [smem:[#allocation0]]
  $region42: #{tpu_custom_call.1} parent=0
    _
  %s9 = ssub.s32 1, %s7
  %s10 = scalar_select 0, %s9, %s7
  $region1: #{tpu_custom_call.1} parent=0
    #allocation2 [shape = 'u8[1048576]{0}', space=vmem, size = 0x100000, scoped, tag = 'input window, operand 1, single buffered']
    #allocation3 [shape = 's32[1]{0}', space=sflag, size = 0x4, scoped, tag = 'scoped memory for tpu_custom_call.1']
    #allocation4 [shape = 'u8[262144]{0}', space=vmem, size = 0x40000, scoped, tag = 'input window, operand 2, single buffered']
    #allocation5 [shape = 's32[1]{0}', space=sflag, size = 0x4, scoped, tag = 'scoped memory for tpu_custom_call.1']
    %11 = vsyncpa [#allocation3], 0
    %12 = vsyncpa [#allocation5], 0
    // Predicated region
    $region2: #{tpu_custom_call.1} parent=1 // pred_check
      _
    $region3: #{tpu_custom_call.1} parent=1 // pred_check_branch
      %14 = sbr.rel (0) target = $region5
    $region4: #{tpu_custom_call.1} parent=1 // pred_region
      _
    $region5: #{tpu_custom_call.1} parent=1 // pred_fallthru
      _
    // Predicated region
    $region6: #{tpu_custom_call.1} parent=1 // pred_check
      _
    $region7: #{tpu_custom_call.1} parent=1 // pred_check_branch
      %16 = sbr.rel (0) target = $region9
    $region8: #{tpu_custom_call.1} parent=1 // pred_region
      %s18 = ssub.s32 32768, 32768
      %19 = vsyncadd [#allocation3], %s18
      %s20 = sshll.u32 [#allocation2], 4
      %s21 = int_to_ptr.vmem [resolvable:$true] %s20
      %26 = dma.hbm_to_vmem [thread:$0]  %s1, 32768, %s21, [#allocation3], 256, 256, 16
    $region9: #{tpu_custom_call.1} parent=1 // pred_fallthru
      _
    // Predicated region
    $region10: #{tpu_custom_call.1} parent=1 // pred_check
      _
    $region11: #{tpu_custom_call.1} parent=1 // pred_check_branch
      %28 = sbr.rel (0) target = $region13
    $region12: #{tpu_custom_call.1} parent=1 // pred_region
      %s30 = ssub.s32 8192, 8192
      %31 = vsyncadd [#allocation5], %s30
      %s32 = sshll.u32 [#allocation4], 4
      %s33 = int_to_ptr.vmem [resolvable:$true] %s32
      %38 = dma.hbm_to_vmem [thread:$0]  %s2, 8192, %s33, [#allocation5], 128, 128, 8
    $region13: #{tpu_custom_call.1} parent=1 // pred_fallthru
      _
    // Predicated region
    $region14: #{tpu_custom_call.1} parent=1 // pred_check
      _
    $region15: #{tpu_custom_call.1} parent=1 // pred_check_branch
      %40 = sbr.rel (0) target = $region17
    $region16: #{tpu_custom_call.1} parent=1 // pred_region
      _
    $region17: #{tpu_custom_call.1} parent=1 // pred_fallthru
      _
    // Predicated region
    $region18: #{tpu_custom_call.1} parent=1 // pred_check
      _
    $region19: #{tpu_custom_call.1} parent=1 // pred_check_branch
      %42 = sbr.rel (0) target = $region21
    $region20: #{tpu_custom_call.1} parent=1 // pred_region
      _
    $region21: #{tpu_custom_call.1} parent=1 // pred_fallthru
      _
    // Predicated region
    $region22: #{tpu_custom_call.1} parent=1 // pred_check
      _
    $region23: #{tpu_custom_call.1} parent=1 // pred_check_branch
      %44 = sbr.rel (0) target = $region25
    $region24: #{tpu_custom_call.1} parent=1 // pred_region
      _
    $region25: #{tpu_custom_call.1} parent=1 // pred_fallthru
      _
    // Predicated region
    $region26: #{tpu_custom_call.1} parent=1 // pred_check
      _
    $region27: #{tpu_custom_call.1} parent=1 // pred_check_branch
      %46 = sbr.rel (0) target = $region29
    $region28: #{tpu_custom_call.1} parent=1 // pred_region
      %47 = dma.done [#allocation3], 32768
    $region29: #{tpu_custom_call.1} parent=1 // pred_fallthru
      _
    // Predicated region
    $region30: #{tpu_custom_call.1} parent=1 // pred_check
      _
    $region31: #{tpu_custom_call.1} parent=1 // pred_check_branch
      %49 = sbr.rel (0) target = $region33
    $region32: #{tpu_custom_call.1} parent=1 // pred_region
      %50 = dma.done [#allocation5], 8192
    $region33: #{tpu_custom_call.1} parent=1 // pred_fallthru
      _
    %v52 = vld [vmem:[%s5] ss:$4 sm:$0xf]
    %s53 = scalar_lea.vmem %s5, 1
    %v54 = vld [vmem:[%s53] ss:$4 sm:$0x3]
    %v55 = vld [vmem:[%s5 + $0x2] sm:$0x1]
    %v56 = vld [vmem:[%s5 + $0x3] sm:$0x1]
    %v57 = vld [vmem:[%s0] sm:$0xff]
    %v58 = vld [vmem:[%s0 + $0x8] sm:$0xff]
    %v59 = vld [vmem:[%s0 + $0x10] sm:$0xff]
    %v60 = vld [vmem:[%s0 + $0x18] sm:$0xff]
    %v61 = vld [vmem:[%s0 + $0x20] sm:$0xff]
    %v62 = vld [vmem:[%s0 + $0x28] sm:$0xff]
    %v63 = vld [vmem:[%s0 + $0x30] sm:$0xff]
    %v64 = vld [vmem:[%s0 + $0x38] sm:$0xff]
    %v65 = vpack.c.bf16 %v57, %v57
    %v66 = vpack.c.bf16 %v58, %v58
    %v67 = vpack.c.bf16 %v59, %v59
    %v68 = vpack.c.bf16 %v60, %v60
    %v69 = vpack.c.bf16 %v61, %v61
    %v70 = vpack.c.bf16 %v62, %v62
    %v71 = vpack.c.bf16 %v63, %v63
    %v72 = vpack.c.bf16 %v64, %v64
    %v73 = vld [vmem:[#allocation2] sm:$0xff]
    %v74 = vld [vmem:[#allocation2 + $0x8] sm:$0xff]
    %v75 = vld [vmem:[#allocation2 + $0x10] sm:$0xff]
    %v76 = vld [vmem:[#allocation2 + $0x18] sm:$0xff]
    %v77 = vld [vmem:[#allocation2 + $0x20] sm:$0xff]
    %v78 = vld [vmem:[#allocation2 + $0x28] sm:$0xff]
    %v79 = vld [vmem:[#allocation2 + $0x30] sm:$0xff]
    %v80 = vld [vmem:[#allocation2 + $0x38] sm:$0xff]
    %v81 = vld [vmem:[#allocation2 + $0x40] sm:$0xff]
    %v82 = vld [vmem:[#allocation2 + $0x48] sm:$0xff]
    %v83 = vld [vmem:[#allocation2 + $0x50] sm:$0xff]
    %v84 = vld [vmem:[#allocation2 + $0x58] sm:$0xff]
    %v85 = vld [vmem:[#allocation2 + $0x60] sm:$0xff]
    %v86 = vld [vmem:[#allocation2 + $0x68] sm:$0xff]
    %v87 = vld [vmem:[#allocation2 + $0x70] sm:$0xff]
    %v88 = vld [vmem:[#allocation2 + $0x78] sm:$0xff]
    %v89 = vld [vmem:[#allocation2 + $0x80] sm:$0xff]
    %v90 = vld [vmem:[#allocation2 + $0x88] sm:$0xff]
    %v91 = vld [vmem:[#allocation2 + $0x90] sm:$0xff]
    %v92 = vld [vmem:[#allocation2 + $0x98] sm:$0xff]
    %v93 = vld [vmem:[#allocation2 + $0xa0] sm:$0xff]
    %v94 = vld [vmem:[#allocation2 + $0xa8] sm:$0xff]
    %v95 = vld [vmem:[#allocation2 + $0xb0] sm:$0xff]
    %v96 = vld [vmem:[#allocation2 + $0xb8] sm:$0xff]
    %v97 = vld [vmem:[#allocation2 + $0xc0] sm:$0xff]
    %v98 = vld [vmem:[#allocation2 + $0xc8] sm:$0xff]
    %v99 = vld [vmem:[#allocation2 + $0xd0] sm:$0xff]
    %v100 = vld [vmem:[#allocation2 + $0xd8] sm:$0xff]
    %v101 = vld [vmem:[#allocation2 + $0xe0] sm:$0xff]
    %v102 = vld [vmem:[#allocation2 + $0xe8] sm:$0xff]
    %v103 = vld [vmem:[#allocation2 + $0xf0] sm:$0xff]
    %v104 = vld [vmem:[#allocation2 + $0xf8] sm:$0xff]
    %v105 = vld [vmem:[#allocation2 + $0x100] sm:$0xff]
    %v106 = vld [vmem:[#allocation2 + $0x108] sm:$0xff]
    %v107 = vld [vmem:[#allocation2 + $0x110] sm:$0xff]
    %v108 = vld [vmem:[#allocation2 + $0x118] sm:$0xff]
    %v109 = vld [vmem:[#allocation2 + $0x120] sm:$0xff]
    %v110 = vld [vmem:[#allocation2 + $0x128] sm:$0xff]
    %v111 = vld [vmem:[#allocation2 + $0x130] sm:$0xff]
    %v112 = vld [vmem:[#allocation2 + $0x138] sm:$0xff]
    %v113 = vld [vmem:[#allocation2 + $0x140] sm:$0xff]
    %v114 = vld [vmem:[#allocation2 + $0x148] sm:$0xff]
    %v115 = vld [vmem:[#allocation2 + $0x150] sm:$0xff]
    %v116 = vld [vmem:[#allocation2 + $0x158] sm:$0xff]
    %v117 = vld [vmem:[#allocation2 + $0x160] sm:$0xff]
    %v118 = vld [vmem:[#allocation2 + $0x168] sm:$0xff]
    %v119 = vld [vmem:[#allocation2 + $0x170] sm:$0xff]
    %v120 = vld [vmem:[#allocation2 + $0x178] sm:$0xff]
    %v121 = vld [vmem:[#allocation2 + $0x180] sm:$0xff]
    %v122 = vld [vmem:[#allocation2 + $0x188] sm:$0xff]
    %v123 = vld [vmem:[#allocation2 + $0x190] sm:$0xff]
    %v124 = vld [vmem:[#allocation2 + $0x198] sm:$0xff]
    %v125 = vld [vmem:[#allocation2 + $0x1a0] sm:$0xff]
    %v126 = vld [vmem:[#allocation2 + $0x1a8] sm:$0xff]
    %v127 = vld [vmem:[#allocation2 + $0x1b0] sm:$0xff]
    %v128 = vld [vmem:[#allocation2 + $0x1b8] sm:$0xff]
    %v129 = vld [vmem:[#allocation2 + $0x1c0] sm:$0xff]
    %v130 = vld [vmem:[#allocation2 + $0x1c8] sm:$0xff]
    %v131 = vld [vmem:[#allocation2 + $0x1d0] sm:$0xff]
    %v132 = vld [vmem:[#allocation2 + $0x1d8] sm:$0xff]
    %v133 = vld [vmem:[#allocation2 + $0x1e0] sm:$0xff]
    %v134 = vld [vmem:[#allocation2 + $0x1e8] sm:$0xff]
    %v135 = vld [vmem:[#allocation2 + $0x1f0] sm:$0xff]
    %v136 = vld [vmem:[#allocation2 + $0x1f8] sm:$0xff]
    %v137 = vld [vmem:[#allocation2 + $0x200] sm:$0xff]
    %v138 = vld [vmem:[#allocation2 + $0x208] sm:$0xff]
    %v139 = vld [vmem:[#allocation2 + $0x210] sm:$0xff]
    %v140 = vld [vmem:[#allocation2 + $0x218] sm:$0xff]
    %v141 = vld [vmem:[#allocation2 + $0x220] sm:$0xff]
    %v142 = vld [vmem:[#allocation2 + $0x228] sm:$0xff]
    %v143 = vld [vmem:[#allocation2 + $0x230] sm:$0xff]
    %v144 = vld [vmem:[#allocation2 + $0x238] sm:$0xff]
    %v145 = vld [vmem:[#allocation2 + $0x240] sm:$0xff]
    %v146 = vld [vmem:[#allocation2 + $0x248] sm:$0xff]
    %v147 = vld [vmem:[#allocation2 + $0x250] sm:$0xff]
    %v148 = vld [vmem:[#allocation2 + $0x258] sm:$0xff]
    %v149 = vld [vmem:[#allocation2 + $0x260] sm:$0xff]
    %v150 = vld [vmem:[#allocation2 + $0x268] sm:$0xff]
    %v151 = vld [vmem:[#allocation2 + $0x270] sm:$0xff]
    %v152 = vld [vmem:[#allocation2 + $0x278] sm:$0xff]
    %v153 = vld [vmem:[#allocation2 + $0x280] sm:$0xff]
    %v154 = vld [vmem:[#allocation2 + $0x288] sm:$0xff]
    %v155 = vld [vmem:[#allocation2 + $0x290] sm:$0xff]
    %v156 = vld [vmem:[#allocation2 + $0x298] sm:$0xff]
    %v157 = vld [vmem:[#allocation2 + $0x2a0] sm:$0xff]
    %v158 = vld [vmem:[#allocation2 + $0x2a8] sm:$0xff]
    %v159 = vld [vmem:[#allocation2 + $0x2b0] sm:$0xff]
    %v160 = vld [vmem:[#allocation2 + $0x2b8] sm:$0xff]
    %v161 = vld [vmem:[#allocation2 + $0x2c0] sm:$0xff]
    %v162 = vld [vmem:[#allocation2 + $0x2c8] sm:$0xff]
    %v163 = vld [vmem:[#allocation2 + $0x2d0] sm:$0xff]
    %v164 = vld [vmem:[#allocation2 + $0x2d8] sm:$0xff]
    %v165 = vld [vmem:[#allocation2 + $0x2e0] sm:$0xff]
    %v166 = vld [vmem:[#allocation2 + $0x2e8] sm:$0xff]
    %v167 = vld [vmem:[#allocation2 + $0x2f0] sm:$0xff]
    %v168 = vld [vmem:[#allocation2 + $0x2f8] sm:$0xff]
    %v169 = vld [vmem:[#allocation2 + $0x300] sm:$0xff]
    %v170 = vld [vmem:[#allocation2 + $0x308] sm:$0xff]
    %v171 = vld [vmem:[#allocation2 + $0x310] sm:$0xff]
    %v172 = vld [vmem:[#allocation2 + $0x318] sm:$0xff]
    %v173 = vld [vmem:[#allocation2 + $0x320] sm:$0xff]
    %v174 = vld [vmem:[#allocation2 + $0x328] sm:$0xff]
    %v175 = vld [vmem:[#allocation2 + $0x330] sm:$0xff]
    %v176 = vld [vmem:[#allocation2 + $0x338] sm:$0xff]
    %v177 = vld [vmem:[#allocation2 + $0x340] sm:$0xff]
    %v178 = vld [vmem:[#allocation2 + $0x348] sm:$0xff]
    %v179 = vld [vmem:[#allocation2 + $0x350] sm:$0xff]
    %v180 = vld [vmem:[#allocation2 + $0x358] sm:$0xff]
    %v181 = vld [vmem:[#allocation2 + $0x360] sm:$0xff]
    %v182 = vld [vmem:[#allocation2 + $0x368] sm:$0xff]
    %v183 = vld [vmem:[#allocation2 + $0x370] sm:$0xff]
    %v184 = vld [vmem:[#allocation2 + $0x378] sm:$0xff]
    %v185 = vld [vmem:[#allocation2 + $0x380] sm:$0xff]
    %v186 = vld [vmem:[#allocation2 + $0x388] sm:$0xff]
    %v187 = vld [vmem:[#allocation2 + $0x390] sm:$0xff]
    %v188 = vld [vmem:[#allocation2 + $0x398] sm:$0xff]
    %v189 = vld [vmem:[#allocation2 + $0x3a0] sm:$0xff]
    %v190 = vld [vmem:[#allocation2 + $0x3a8] sm:$0xff]
    %v191 = vld [vmem:[#allocation2 + $0x3b0] sm:$0xff]
    %v192 = vld [vmem:[#allocation2 + $0x3b8] sm:$0xff]
    %v193 = vld [vmem:[#allocation2 + $0x3c0] sm:$0xff]
    %v194 = vld [vmem:[#allocation2 + $0x3c8] sm:$0xff]
    %v195 = vld [vmem:[#allocation2 + $0x3d0] sm:$0xff]
    %v196 = vld [vmem:[#allocation2 + $0x3d8] sm:$0xff]
    %v197 = vld [vmem:[#allocation2 + $0x3e0] sm:$0xff]
    %v198 = vld [vmem:[#allocation2 + $0x3e8] sm:$0xff]
    %v199 = vld [vmem:[#allocation2 + $0x3f0] sm:$0xff]
    %v200 = vld [vmem:[#allocation2 + $0x3f8] sm:$0xff]
    %v201 = vld [vmem:[#allocation2 + $0x400] sm:$0xff]
    %v202 = vld [vmem:[#allocation2 + $0x408] sm:$0xff]
    %v203 = vld [vmem:[#allocation2 + $0x410] sm:$0xff]
    %v204 = vld [vmem:[#allocation2 + $0x418] sm:$0xff]
    %v205 = vld [vmem:[#allocation2 + $0x420] sm:$0xff]
    %v206 = vld [vmem:[#allocation2 + $0x428] sm:$0xff]
    %v207 = vld [vmem:[#allocation2 + $0x430] sm:$0xff]
    %v208 = vld [vmem:[#allocation2 + $0x438] sm:$0xff]
    %v209 = vld [vmem:[#allocation2 + $0x440] sm:$0xff]
    %v210 = vld [vmem:[#allocation2 + $0x448] sm:$0xff]
    %v211 = vld [vmem:[#allocation2 + $0x450] sm:$0xff]
    %v212 = vld [vmem:[#allocation2 + $0x458] sm:$0xff]
    %v213 = vld [vmem:[#allocation2 + $0x460] sm:$0xff]
    %v214 = vld [vmem:[#allocation2 + $0x468] sm:$0xff]
    %v215 = vld [vmem:[#allocation2 + $0x470] sm:$0xff]
    %v216 = vld [vmem:[#allocation2 + $0x478] sm:$0xff]
    %v217 = vld [vmem:[#allocation2 + $0x480] sm:$0xff]
    %v218 = vld [vmem:[#allocation2 + $0x488] sm:$0xff]
    %v219 = vld [vmem:[#allocation2 + $0x490] sm:$0xff]
    %v220 = vld [vmem:[#allocation2 + $0x498] sm:$0xff]
    %v221 = vld [vmem:[#allocation2 + $0x4a0] sm:$0xff]
    %v222 = vld [vmem:[#allocation2 + $0x4a8] sm:$0xff]
    %v223 = vld [vmem:[#allocation2 + $0x4b0] sm:$0xff]
    %v224 = vld [vmem:[#allocation2 + $0x4b8] sm:$0xff]
    %v225 = vld [vmem:[#allocation2 + $0x4c0] sm:$0xff]
    %v226 = vld [vmem:[#allocation2 + $0x4c8] sm:$0xff]
    %v227 = vld [vmem:[#allocation2 + $0x4d0] sm:$0xff]
    %v228 = vld [vmem:[#allocation2 + $0x4d8] sm:$0xff]
    %v229 = vld [vmem:[#allocation2 + $0x4e0] sm:$0xff]
    %v230 = vld [vmem:[#allocation2 + $0x4e8] sm:$0xff]
    %v231 = vld [vmem:[#allocation2 + $0x4f0] sm:$0xff]
    %v232 = vld [vmem:[#allocation2 + $0x4f8] sm:$0xff]
    %v233 = vld [vmem:[#allocation2 + $0x500] sm:$0xff]
    %v234 = vld [vmem:[#allocation2 + $0x508] sm:$0xff]
    %v235 = vld [vmem:[#allocation2 + $0x510] sm:$0xff]
    %v236 = vld [vmem:[#allocation2 + $0x518] sm:$0xff]
    %v237 = vld [vmem:[#allocation2 + $0x520] sm:$0xff]
    %v238 = vld [vmem:[#allocation2 + $0x528] sm:$0xff]
    %v239 = vld [vmem:[#allocation2 + $0x530] sm:$0xff]
    %v240 = vld [vmem:[#allocation2 + $0x538] sm:$0xff]
    %v241 = vld [vmem:[#allocation2 + $0x540] sm:$0xff]
    %v242 = vld [vmem:[#allocation2 + $0x548] sm:$0xff]
    %v243 = vld [vmem:[#allocation2 + $0x550] sm:$0xff]
    %v244 = vld [vmem:[#allocation2 + $0x558] sm:$0xff]
    %v245 = vld [vmem:[#allocation2 + $0x560] sm:$0xff]
    %v246 = vld [vmem:[#allocation2 + $0x568] sm:$0xff]
    %v247 = vld [vmem:[#allocation2 + $0x570] sm:$0xff]
    %v248 = vld [vmem:[#allocation2 + $0x578] sm:$0xff]
    %v249 = vld [vmem:[#allocation2 + $0x580] sm:$0xff]
    %v250 = vld [vmem:[#allocation2 + $0x588] sm:$0xff]
    %v251 = vld [vmem:[#allocation2 + $0x590] sm:$0xff]
    %v252 = vld [vmem:[#allocation2 + $0x598] sm:$0xff]
    %v253 = vld [vmem:[#allocation2 + $0x5a0] sm:$0xff]
    %v254 = vld [vmem:[#allocation2 + $0x5a8] sm:$0xff]
    %v255 = vld [vmem:[#allocation2 + $0x5b0] sm:$0xff]
    %v256 = vld [vmem:[#allocation2 + $0x5b8] sm:$0xff]
    %v257 = vld [vmem:[#allocation2 + $0x5c0] sm:$0xff]
    %v258 = vld [vmem:[#allocation2 + $0x5c8] sm:$0xff]
    %v259 = vld [vmem:[#allocation2 + $0x5d0] sm:$0xff]
    %v260 = vld [vmem:[#allocation2 + $0x5d8] sm:$0xff]
    %v261 = vld [vmem:[#allocation2 + $0x5e0] sm:$0xff]
    %v262 = vld [vmem:[#allocation2 + $0x5e8] sm:$0xff]
    %v263 = vld [vmem:[#allocation2 + $0x5f0] sm:$0xff]
    %v264 = vld [vmem:[#allocation2 + $0x5f8] sm:$0xff]
    %v265 = vld [vmem:[#allocation2 + $0x600] sm:$0xff]
    %v266 = vld [vmem:[#allocation2 + $0x608] sm:$0xff]
    %v267 = vld [vmem:[#allocation2 + $0x610] sm:$0xff]
    %v268 = vld [vmem:[#allocation2 + $0x618] sm:$0xff]
    %v269 = vld [vmem:[#allocation2 + $0x620] sm:$0xff]
    %v270 = vld [vmem:[#allocation2 + $0x628] sm:$0xff]
    %v271 = vld [vmem:[#allocation2 + $0x630] sm:$0xff]
    %v272 = vld [vmem:[#allocation2 + $0x638] sm:$0xff]
    %v273 = vld [vmem:[#allocation2 + $0x640] sm:$0xff]
    %v274 = vld [vmem:[#allocation2 + $0x648] sm:$0xff]
    %v275 = vld [vmem:[#allocation2 + $0x650] sm:$0xff]
    %v276 = vld [vmem:[#allocation2 + $0x658] sm:$0xff]
    %v277 = vld [vmem:[#allocation2 + $0x660] sm:$0xff]
    %v278 = vld [vmem:[#allocation2 + $0x668] sm:$0xff]
    %v279 = vld [vmem:[#allocation2 + $0x670] sm:$0xff]
    %v280 = vld [vmem:[#allocation2 + $0x678] sm:$0xff]
    %v281 = vld [vmem:[#allocation2 + $0x680] sm:$0xff]
    %v282 = vld [vmem:[#allocation2 + $0x688] sm:$0xff]
    %v283 = vld [vmem:[#allocation2 + $0x690] sm:$0xff]
    %v284 = vld [vmem:[#allocation2 + $0x698] sm:$0xff]
    %v285 = vld [vmem:[#allocation2 + $0x6a0] sm:$0xff]
    %v286 = vld [vmem:[#allocation2 + $0x6a8] sm:$0xff]
    %v287 = vld [vmem:[#allocation2 + $0x6b0] sm:$0xff]
    %v288 = vld [vmem:[#allocation2 + $0x6b8] sm:$0xff]
    %v289 = vld [vmem:[#allocation2 + $0x6c0] sm:$0xff]
    %v290 = vld [vmem:[#allocation2 + $0x6c8] sm:$0xff]
    %v291 = vld [vmem:[#allocation2 + $0x6d0] sm:$0xff]
    %v292 = vld [vmem:[#allocation2 + $0x6d8] sm:$0xff]
    %v293 = vld [vmem:[#allocation2 + $0x6e0] sm:$0xff]
    %v294 = vld [vmem:[#allocation2 + $0x6e8] sm:$0xff]
    %v295 = vld [vmem:[#allocation2 + $0x6f0] sm:$0xff]
    %v296 = vld [vmem:[#allocation2 + $0x6f8] sm:$0xff]
    %v297 = vld [vmem:[#allocation2 + $0x700] sm:$0xff]
    %v298 = vld [vmem:[#allocation2 + $0x708] sm:$0xff]
    %v299 = vld [vmem:[#allocation2 + $0x710] sm:$0xff]
    %v300 = vld [vmem:[#allocation2 + $0x718] sm:$0xff]
    %v301 = vld [vmem:[#allocation2 + $0x720] sm:$0xff]
    %v302 = vld [vmem:[#allocation2 + $0x728] sm:$0xff]
    %v303 = vld [vmem:[#allocation2 + $0x730] sm:$0xff]
    %v304 = vld [vmem:[#allocation2 + $0x738] sm:$0xff]
    %v305 = vld [vmem:[#allocation2 + $0x740] sm:$0xff]
    %v306 = vld [vmem:[#allocation2 + $0x748] sm:$0xff]
    %v307 = vld [vmem:[#allocation2 + $0x750] sm:$0xff]
    %v308 = vld [vmem:[#allocation2 + $0x758] sm:$0xff]
    %v309 = vld [vmem:[#allocation2 + $0x760] sm:$0xff]
    %v310 = vld [vmem:[#allocation2 + $0x768] sm:$0xff]
    %v311 = vld [vmem:[#allocation2 + $0x770] sm:$0xff]
    %v312 = vld [vmem:[#allocation2 + $0x778] sm:$0xff]
    %v313 = vld [vmem:[#allocation2 + $0x780] sm:$0xff]
    %v314 = vld [vmem:[#allocation2 + $0x788] sm:$0xff]
    %v315 = vld [vmem:[#allocation2 + $0x790] sm:$0xff]
    %v316 = vld [vmem:[#allocation2 + $0x798] sm:$0xff]
    %v317 = vld [vmem:[#allocation2 + $0x7a0] sm:$0xff]
    %v318 = vld [vmem:[#allocation2 + $0x7a8] sm:$0xff]
    %v319 = vld [vmem:[#allocation2 + $0x7b0] sm:$0xff]
    %v320 = vld [vmem:[#allocation2 + $0x7b8] sm:$0xff]
    %v321 = vld [vmem:[#allocation2 + $0x7c0] sm:$0xff]
    %v322 = vld [vmem:[#allocation2 + $0x7c8] sm:$0xff]
    %v323 = vld [vmem:[#allocation2 + $0x7d0] sm:$0xff]
    %v324 = vld [vmem:[#allocation2 + $0x7d8] sm:$0xff]
    %v325 = vld [vmem:[#allocation2 + $0x7e0] sm:$0xff]
    %v326 = vld [vmem:[#allocation2 + $0x7e8] sm:$0xff]
    %v327 = vld [vmem:[#allocation2 + $0x7f0] sm:$0xff]
    %v328 = vld [vmem:[#allocation2 + $0x7f8] sm:$0xff]
    %v330 = vlaneseq
    %v331 = vshrl.u32 %v330, 7
    %v332 = vsub.s32 0, %v331
    %v333 = vrot.slane %v52, %v332
    %v334 = vlaneseq
    %v335 = vshrl.u32 %v334, 7
    %v336 = vsub.s32 1, %v335
    %v337 = vrot.slane %v52, %v336
    %v338 = vlaneseq
    %v339 = vshrl.u32 %v338, 7
    %v340 = vsub.s32 2, %v339
    %v341 = vrot.slane %v52, %v340
    %v342 = vlaneseq
    %v343 = vshrl.u32 %v342, 7
    %v344 = vsub.s32 3, %v343
    %v345 = vrot.slane %v52, %v344
    %v606 = vunpack.c.l.b16 %v73
    %v607 = vunpack.c.h.b16 %v73
    %v608 = vunpack.c.l.b16 %v74
    %v609 = vunpack.c.h.b16 %v74
    %v610 = vunpack.c.l.b16 %v75
    %v611 = vunpack.c.h.b16 %v75
    %v612 = vunpack.c.l.b16 %v76
    %v613 = vunpack.c.h.b16 %v76
    %v614 = vunpack.c.l.b16 %v77
    %v615 = vunpack.c.h.b16 %v77
    %v616 = vunpack.c.l.b16 %v78
    %v617 = vunpack.c.h.b16 %v78
    %v618 = vunpack.c.l.b16 %v79
    %v619 = vunpack.c.h.b16 %v79
    %v620 = vunpack.c.l.b16 %v80
    %v621 = vunpack.c.h.b16 %v80
    %v622 = vunpack.c.l.b16 %v81
    %v623 = vunpack.c.h.b16 %v81
    %v624 = vunpack.c.l.b16 %v82
    %v625 = vunpack.c.h.b16 %v82
    %v626 = vunpack.c.l.b16 %v83
    %v627 = vunpack.c.h.b16 %v83
    %v628 = vunpack.c.l.b16 %v84
    %v629 = vunpack.c.h.b16 %v84
    %v630 = vunpack.c.l.b16 %v85
    %v631 = vunpack.c.h.b16 %v85
    %v632 = vunpack.c.l.b16 %v86
    %v633 = vunpack.c.h.b16 %v86
    %v634 = vunpack.c.l.b16 %v87
    %v635 = vunpack.c.h.b16 %v87
    %v636 = vunpack.c.l.b16 %v88
    %v637 = vunpack.c.h.b16 %v88
    %v638 = vunpack.c.l.b16 %v89
    %v639 = vunpack.c.h.b16 %v89
    %v640 = vunpack.c.l.b16 %v90
    %v641 = vunpack.c.h.b16 %v90
    %v642 = vunpack.c.l.b16 %v91
    %v643 = vunpack.c.h.b16 %v91
    %v644 = vunpack.c.l.b16 %v92
    %v645 = vunpack.c.h.b16 %v92
    %v646 = vunpack.c.l.b16 %v93
    %v647 = vunpack.c.h.b16 %v93
    %v648 = vunpack.c.l.b16 %v94
    %v649 = vunpack.c.h.b16 %v94
    %v650 = vunpack.c.l.b16 %v95
    %v651 = vunpack.c.h.b16 %v95
    %v652 = vunpack.c.l.b16 %v96
    %v653 = vunpack.c.h.b16 %v96
    %v654 = vunpack.c.l.b16 %v97
    %v655 = vunpack.c.h.b16 %v97
    %v656 = vunpack.c.l.b16 %v98
    %v657 = vunpack.c.h.b16 %v98
    %v658 = vunpack.c.l.b16 %v99
    %v659 = vunpack.c.h.b16 %v99
    %v660 = vunpack.c.l.b16 %v100
    %v661 = vunpack.c.h.b16 %v100
    %v662 = vunpack.c.l.b16 %v101
    %v663 = vunpack.c.h.b16 %v101
    %v664 = vunpack.c.l.b16 %v102
    %v665 = vunpack.c.h.b16 %v102
    %v666 = vunpack.c.l.b16 %v103
    %v667 = vunpack.c.h.b16 %v103
    %v668 = vunpack.c.l.b16 %v104
    %v669 = vunpack.c.h.b16 %v104
    %v670 = vunpack.c.l.b16 %v105
    %v671 = vunpack.c.h.b16 %v105
    %v672 = vunpack.c.l.b16 %v106
    %v673 = vunpack.c.h.b16 %v106
    %v674 = vunpack.c.l.b16 %v107
    %v675 = vunpack.c.h.b16 %v107
    %v676 = vunpack.c.l.b16 %v108
    %v677 = vunpack.c.h.b16 %v108
    %v678 = vunpack.c.l.b16 %v109
    %v679 = vunpack.c.h.b16 %v109
    %v680 = vunpack.c.l.b16 %v110
    %v681 = vunpack.c.h.b16 %v110
    %v682 = vunpack.c.l.b16 %v111
    %v683 = vunpack.c.h.b16 %v111
    %v684 = vunpack.c.l.b16 %v112
    %v685 = vunpack.c.h.b16 %v112
    %v686 = vunpack.c.l.b16 %v113
    %v687 = vunpack.c.h.b16 %v113
    %v688 = vunpack.c.l.b16 %v114
    %v689 = vunpack.c.h.b16 %v114
    %v690 = vunpack.c.l.b16 %v115
    %v691 = vunpack.c.h.b16 %v115
    %v692 = vunpack.c.l.b16 %v116
    %v693 = vunpack.c.h.b16 %v116
    %v694 = vunpack.c.l.b16 %v117
    %v695 = vunpack.c.h.b16 %v117
    %v696 = vunpack.c.l.b16 %v118
    %v697 = vunpack.c.h.b16 %v118
    %v698 = vunpack.c.l.b16 %v119
    %v699 = vunpack.c.h.b16 %v119
    %v700 = vunpack.c.l.b16 %v120
    %v701 = vunpack.c.h.b16 %v120
    %v702 = vunpack.c.l.b16 %v121
    %v703 = vunpack.c.h.b16 %v121
    %v704 = vunpack.c.l.b16 %v122
    %v705 = vunpack.c.h.b16 %v122
    %v706 = vunpack.c.l.b16 %v123
    %v707 = vunpack.c.h.b16 %v123
    %v708 = vunpack.c.l.b16 %v124
    %v709 = vunpack.c.h.b16 %v124
    %v710 = vunpack.c.l.b16 %v125
    %v711 = vunpack.c.h.b16 %v125
    %v712 = vunpack.c.l.b16 %v126
    %v713 = vunpack.c.h.b16 %v126
    %v714 = vunpack.c.l.b16 %v127
    %v715 = vunpack.c.h.b16 %v127
    %v716 = vunpack.c.l.b16 %v128
    %v717 = vunpack.c.h.b16 %v128
    %v718 = vunpack.c.l.b16 %v129
    %v719 = vunpack.c.h.b16 %v129
    %v720 = vunpack.c.l.b16 %v130
    %v721 = vunpack.c.h.b16 %v130
    %v722 = vunpack.c.l.b16 %v131
    %v723 = vunpack.c.h.b16 %v131
    %v724 = vunpack.c.l.b16 %v132
    %v725 = vunpack.c.h.b16 %v132
    %v726 = vunpack.c.l.b16 %v133
    %v727 = vunpack.c.h.b16 %v133
    %v728 = vunpack.c.l.b16 %v134
    %v729 = vunpack.c.h.b16 %v134
    %v730 = vunpack.c.l.b16 %v135
    %v731 = vunpack.c.h.b16 %v135
    %v732 = vunpack.c.l.b16 %v136
    %v733 = vunpack.c.h.b16 %v136
    %v734 = vunpack.c.l.b16 %v137
    %v735 = vunpack.c.h.b16 %v137
    %v736 = vunpack.c.l.b16 %v138
    %v737 = vunpack.c.h.b16 %v138
    %v738 = vunpack.c.l.b16 %v139
    %v739 = vunpack.c.h.b16 %v139
    %v740 = vunpack.c.l.b16 %v140
    %v741 = vunpack.c.h.b16 %v140
    %v742 = vunpack.c.l.b16 %v141
    %v743 = vunpack.c.h.b16 %v141
    %v744 = vunpack.c.l.b16 %v142
    %v745 = vunpack.c.h.b16 %v142
    %v746 = vunpack.c.l.b16 %v143
    %v747 = vunpack.c.h.b16 %v143
    %v748 = vunpack.c.l.b16 %v144
    %v749 = vunpack.c.h.b16 %v144
    %v750 = vunpack.c.l.b16 %v145
    %v751 = vunpack.c.h.b16 %v145
    %v752 = vunpack.c.l.b16 %v146
    %v753 = vunpack.c.h.b16 %v146
    %v754 = vunpack.c.l.b16 %v147
    %v755 = vunpack.c.h.b16 %v147
    %v756 = vunpack.c.l.b16 %v148
    %v757 = vunpack.c.h.b16 %v148
    %v758 = vunpack.c.l.b16 %v149
    %v759 = vunpack.c.h.b16 %v149
    %v760 = vunpack.c.l.b16 %v150
    %v761 = vunpack.c.h.b16 %v150
    %v762 = vunpack.c.l.b16 %v151
    %v763 = vunpack.c.h.b16 %v151
    %v764 = vunpack.c.l.b16 %v152
    %v765 = vunpack.c.h.b16 %v152
    %v766 = vunpack.c.l.b16 %v153
    %v767 = vunpack.c.h.b16 %v153
    %v768 = vunpack.c.l.b16 %v154
    %v769 = vunpack.c.h.b16 %v154
    %v770 = vunpack.c.l.b16 %v155
    %v771 = vunpack.c.h.b16 %v155
    %v772 = vunpack.c.l.b16 %v156
    %v773 = vunpack.c.h.b16 %v156
    %v774 = vunpack.c.l.b16 %v157
    %v775 = vunpack.c.h.b16 %v157
    %v776 = vunpack.c.l.b16 %v158
    %v777 = vunpack.c.h.b16 %v158
    %v778 = vunpack.c.l.b16 %v159
    %v779 = vunpack.c.h.b16 %v159
    %v780 = vunpack.c.l.b16 %v160
    %v781 = vunpack.c.h.b16 %v160
    %v782 = vunpack.c.l.b16 %v161
    %v783 = vunpack.c.h.b16 %v161
    %v784 = vunpack.c.l.b16 %v162
    %v785 = vunpack.c.h.b16 %v162
    %v786 = vunpack.c.l.b16 %v163
    %v787 = vunpack.c.h.b16 %v163
    %v788 = vunpack.c.l.b16 %v164
    %v789 = vunpack.c.h.b16 %v164
    %v790 = vunpack.c.l.b16 %v165
    %v791 = vunpack.c.h.b16 %v165
    %v792 = vunpack.c.l.b16 %v166
    %v793 = vunpack.c.h.b16 %v166
    %v794 = vunpack.c.l.b16 %v167
    %v795 = vunpack.c.h.b16 %v167
    %v796 = vunpack.c.l.b16 %v168
    %v797 = vunpack.c.h.b16 %v168
    %v798 = vunpack.c.l.b16 %v169
    %v799 = vunpack.c.h.b16 %v169
    %v800 = vunpack.c.l.b16 %v170
    %v801 = vunpack.c.h.b16 %v170
    %v802 = vunpack.c.l.b16 %v171
    %v803 = vunpack.c.h.b16 %v171
    %v804 = vunpack.c.l.b16 %v172
    %v805 = vunpack.c.h.b16 %v172
    %v806 = vunpack.c.l.b16 %v173
    %v807 = vunpack.c.h.b16 %v173
    %v808 = vunpack.c.l.b16 %v174
    %v809 = vunpack.c.h.b16 %v174
    %v810 = vunpack.c.l.b16 %v175
    %v811 = vunpack.c.h.b16 %v175
    %v812 = vunpack.c.l.b16 %v176
    %v813 = vunpack.c.h.b16 %v176
    %v814 = vunpack.c.l.b16 %v177
    %v815 = vunpack.c.h.b16 %v177
    %v816 = vunpack.c.l.b16 %v178
    %v817 = vunpack.c.h.b16 %v178
    %v818 = vunpack.c.l.b16 %v179
    %v819 = vunpack.c.h.b16 %v179
    %v820 = vunpack.c.l.b16 %v180
    %v821 = vunpack.c.h.b16 %v180
    %v822 = vunpack.c.l.b16 %v181
    %v823 = vunpack.c.h.b16 %v181
    %v824 = vunpack.c.l.b16 %v182
    %v825 = vunpack.c.h.b16 %v182
    %v826 = vunpack.c.l.b16 %v183
    %v827 = vunpack.c.h.b16 %v183
    %v828 = vunpack.c.l.b16 %v184
    %v829 = vunpack.c.h.b16 %v184
    %v830 = vunpack.c.l.b16 %v185
    %v831 = vunpack.c.h.b16 %v185
    %v832 = vunpack.c.l.b16 %v186
    %v833 = vunpack.c.h.b16 %v186
    %v834 = vunpack.c.l.b16 %v187
    %v835 = vunpack.c.h.b16 %v187
    %v836 = vunpack.c.l.b16 %v188
    %v837 = vunpack.c.h.b16 %v188
    %v838 = vunpack.c.l.b16 %v189
    %v839 = vunpack.c.h.b16 %v189
    %v840 = vunpack.c.l.b16 %v190
    %v841 = vunpack.c.h.b16 %v190
    %v842 = vunpack.c.l.b16 %v191
    %v843 = vunpack.c.h.b16 %v191
    %v844 = vunpack.c.l.b16 %v192
    %v845 = vunpack.c.h.b16 %v192
    %v846 = vunpack.c.l.b16 %v193
    %v847 = vunpack.c.h.b16 %v193
    %v848 = vunpack.c.l.b16 %v194
    %v849 = vunpack.c.h.b16 %v194
    %v850 = vunpack.c.l.b16 %v195
    %v851 = vunpack.c.h.b16 %v195
    %v852 = vunpack.c.l.b16 %v196
    %v853 = vunpack.c.h.b16 %v196
    %v854 = vunpack.c.l.b16 %v197
    %v855 = vunpack.c.h.b16 %v197
    %v856 = vunpack.c.l.b16 %v198
    %v857 = vunpack.c.h.b16 %v198
    %v858 = vunpack.c.l.b16 %v199
    %v859 = vunpack.c.h.b16 %v199
    %v860 = vunpack.c.l.b16 %v200
    %v861 = vunpack.c.h.b16 %v200
    %v862 = vunpack.c.l.b16 %v201
    %v863 = vunpack.c.h.b16 %v201
    %v864 = vunpack.c.l.b16 %v202
    %v865 = vunpack.c.h.b16 %v202
    %v866 = vunpack.c.l.b16 %v203
    %v867 = vunpack.c.h.b16 %v203
    %v868 = vunpack.c.l.b16 %v204
    %v869 = vunpack.c.h.b16 %v204
    %v870 = vunpack.c.l.b16 %v205
    %v871 = vunpack.c.h.b16 %v205
    %v872 = vunpack.c.l.b16 %v206
    %v873 = vunpack.c.h.b16 %v206
    %v874 = vunpack.c.l.b16 %v207
    %v875 = vunpack.c.h.b16 %v207
    %v876 = vunpack.c.l.b16 %v208
    %v877 = vunpack.c.h.b16 %v208
    %v878 = vunpack.c.l.b16 %v209
    %v879 = vunpack.c.h.b16 %v209
    %v880 = vunpack.c.l.b16 %v210
    %v881 = vunpack.c.h.b16 %v210
    %v882 = vunpack.c.l.b16 %v211
    %v883 = vunpack.c.h.b16 %v211
    %v884 = vunpack.c.l.b16 %v212
    %v885 = vunpack.c.h.b16 %v212
    %v886 = vunpack.c.l.b16 %v213
    %v887 = vunpack.c.h.b16 %v213
    %v888 = vunpack.c.l.b16 %v214
    %v889 = vunpack.c.h.b16 %v214
    %v890 = vunpack.c.l.b16 %v215
    %v891 = vunpack.c.h.b16 %v215
    %v892 = vunpack.c.l.b16 %v216
    %v893 = vunpack.c.h.b16 %v216
    %v894 = vunpack.c.l.b16 %v217
    %v895 = vunpack.c.h.b16 %v217
    %v896 = vunpack.c.l.b16 %v218
    %v897 = vunpack.c.h.b16 %v218
    %v898 = vunpack.c.l.b16 %v219
    %v899 = vunpack.c.h.b16 %v219
    %v900 = vunpack.c.l.b16 %v220
    %v901 = vunpack.c.h.b16 %v220
    %v902 = vunpack.c.l.b16 %v221
    %v903 = vunpack.c.h.b16 %v221
    %v904 = vunpack.c.l.b16 %v222
    %v905 = vunpack.c.h.b16 %v222
    %v906 = vunpack.c.l.b16 %v223
    %v907 = vunpack.c.h.b16 %v223
    %v908 = vunpack.c.l.b16 %v224
    %v909 = vunpack.c.h.b16 %v224
    %v910 = vunpack.c.l.b16 %v225
    %v911 = vunpack.c.h.b16 %v225
    %v912 = vunpack.c.l.b16 %v226
    %v913 = vunpack.c.h.b16 %v226
    %v914 = vunpack.c.l.b16 %v227
    %v915 = vunpack.c.h.b16 %v227
    %v916 = vunpack.c.l.b16 %v228
    %v917 = vunpack.c.h.b16 %v228
    %v918 = vunpack.c.l.b16 %v229
    %v919 = vunpack.c.h.b16 %v229
    %v920 = vunpack.c.l.b16 %v230
    %v921 = vunpack.c.h.b16 %v230
    %v922 = vunpack.c.l.b16 %v231
    %v923 = vunpack.c.h.b16 %v231
    %v924 = vunpack.c.l.b16 %v232
    %v925 = vunpack.c.h.b16 %v232
    %v926 = vunpack.c.l.b16 %v233
    %v927 = vunpack.c.h.b16 %v233
    %v928 = vunpack.c.l.b16 %v234
    %v929 = vunpack.c.h.b16 %v234
    %v930 = vunpack.c.l.b16 %v235
    %v931 = vunpack.c.h.b16 %v235
    %v932 = vunpack.c.l.b16 %v236
    %v933 = vunpack.c.h.b16 %v236
    %v934 = vunpack.c.l.b16 %v237
    %v935 = vunpack.c.h.b16 %v237
    %v936 = vunpack.c.l.b16 %v238
    %v937 = vunpack.c.h.b16 %v238
    %v938 = vunpack.c.l.b16 %v239
    %v939 = vunpack.c.h.b16 %v239
    %v940 = vunpack.c.l.b16 %v240
    %v941 = vunpack.c.h.b16 %v240
    %v942 = vunpack.c.l.b16 %v241
    %v943 = vunpack.c.h.b16 %v241
    %v944 = vunpack.c.l.b16 %v242
    %v945 = vunpack.c.h.b16 %v242
    %v946 = vunpack.c.l.b16 %v243
    %v947 = vunpack.c.h.b16 %v243
    %v948 = vunpack.c.l.b16 %v244
    %v949 = vunpack.c.h.b16 %v244
    %v950 = vunpack.c.l.b16 %v245
    %v951 = vunpack.c.h.b16 %v245
    %v952 = vunpack.c.l.b16 %v246
    %v953 = vunpack.c.h.b16 %v246
    %v954 = vunpack.c.l.b16 %v247
    %v955 = vunpack.c.h.b16 %v247
    %v956 = vunpack.c.l.b16 %v248
    %v957 = vunpack.c.h.b16 %v248
    %v958 = vunpack.c.l.b16 %v249
    %v959 = vunpack.c.h.b16 %v249
    %v960 = vunpack.c.l.b16 %v250
    %v961 = vunpack.c.h.b16 %v250
    %v962 = vunpack.c.l.b16 %v251
    %v963 = vunpack.c.h.b16 %v251
    %v964 = vunpack.c.l.b16 %v252
    %v965 = vunpack.c.h.b16 %v252
    %v966 = vunpack.c.l.b16 %v253
    %v967 = vunpack.c.h.b16 %v253
    %v968 = vunpack.c.l.b16 %v254
    %v969 = vunpack.c.h.b16 %v254
    %v970 = vunpack.c.l.b16 %v255
    %v971 = vunpack.c.h.b16 %v255
    %v972 = vunpack.c.l.b16 %v256
    %v973 = vunpack.c.h.b16 %v256
    %v974 = vunpack.c.l.b16 %v257
    %v975 = vunpack.c.h.b16 %v257
    %v976 = vunpack.c.l.b16 %v258
    %v977 = vunpack.c.h.b16 %v258
    %v978 = vunpack.c.l.b16 %v259
    %v979 = vunpack.c.h.b16 %v259
    %v980 = vunpack.c.l.b16 %v260
    %v981 = vunpack.c.h.b16 %v260
    %v982 = vunpack.c.l.b16 %v261
    %v983 = vunpack.c.h.b16 %v261
    %v984 = vunpack.c.l.b16 %v262
    %v985 = vunpack.c.h.b16 %v262
    %v986 = vunpack.c.l.b16 %v263
    %v987 = vunpack.c.h.b16 %v263
    %v988 = vunpack.c.l.b16 %v264
    %v989 = vunpack.c.h.b16 %v264
    %v990 = vunpack.c.l.b16 %v265
    %v991 = vunpack.c.h.b16 %v265
    %v992 = vunpack.c.l.b16 %v266
    %v993 = vunpack.c.h.b16 %v266
    %v994 = vunpack.c.l.b16 %v267
    %v995 = vunpack.c.h.b16 %v267
    %v996 = vunpack.c.l.b16 %v268
    %v997 = vunpack.c.h.b16 %v268
    %v998 = vunpack.c.l.b16 %v269
    %v999 = vunpack.c.h.b16 %v269
    %v1000 = vunpack.c.l.b16 %v270
    %v1001 = vunpack.c.h.b16 %v270
    %v1002 = vunpack.c.l.b16 %v271
    %v1003 = vunpack.c.h.b16 %v271
    %v1004 = vunpack.c.l.b16 %v272
    %v1005 = vunpack.c.h.b16 %v272
    %v1006 = vunpack.c.l.b16 %v273
    %v1007 = vunpack.c.h.b16 %v273
    %v1008 = vunpack.c.l.b16 %v274
    %v1009 = vunpack.c.h.b16 %v274
    %v1010 = vunpack.c.l.b16 %v275
    %v1011 = vunpack.c.h.b16 %v275
    %v1012 = vunpack.c.l.b16 %v276
    %v1013 = vunpack.c.h.b16 %v276
    %v1014 = vunpack.c.l.b16 %v277
    %v1015 = vunpack.c.h.b16 %v277
    %v1016 = vunpack.c.l.b16 %v278
    %v1017 = vunpack.c.h.b16 %v278
    %v1018 = vunpack.c.l.b16 %v279
    %v1019 = vunpack.c.h.b16 %v279
    %v1020 = vunpack.c.l.b16 %v280
    %v1021 = vunpack.c.h.b16 %v280
    %v1022 = vunpack.c.l.b16 %v281
    %v1023 = vunpack.c.h.b16 %v281
    %v1024 = vunpack.c.l.b16 %v282
    %v1025 = vunpack.c.h.b16 %v282
    %v1026 = vunpack.c.l.b16 %v283
    %v1027 = vunpack.c.h.b16 %v283
    %v1028 = vunpack.c.l.b16 %v284
    %v1029 = vunpack.c.h.b16 %v284
    %v1030 = vunpack.c.l.b16 %v285
    %v1031 = vunpack.c.h.b16 %v285
    %v1032 = vunpack.c.l.b16 %v286
    %v1033 = vunpack.c.h.b16 %v286
    %v1034 = vunpack.c.l.b16 %v287
    %v1035 = vunpack.c.h.b16 %v287
    %v1036 = vunpack.c.l.b16 %v288
    %v1037 = vunpack.c.h.b16 %v288
    %v1038 = vunpack.c.l.b16 %v289
    %v1039 = vunpack.c.h.b16 %v289
    %v1040 = vunpack.c.l.b16 %v290
    %v1041 = vunpack.c.h.b16 %v290
    %v1042 = vunpack.c.l.b16 %v291
    %v1043 = vunpack.c.h.b16 %v291
    %v1044 = vunpack.c.l.b16 %v292
    %v1045 = vunpack.c.h.b16 %v292
    %v1046 = vunpack.c.l.b16 %v293
    %v1047 = vunpack.c.h.b16 %v293
    %v1048 = vunpack.c.l.b16 %v294
    %v1049 = vunpack.c.h.b16 %v294
    %v1050 = vunpack.c.l.b16 %v295
    %v1051 = vunpack.c.h.b16 %v295
    %v1052 = vunpack.c.l.b16 %v296
    %v1053 = vunpack.c.h.b16 %v296
    %v1054 = vunpack.c.l.b16 %v297
    %v1055 = vunpack.c.h.b16 %v297
    %v1056 = vunpack.c.l.b16 %v298
    %v1057 = vunpack.c.h.b16 %v298
    %v1058 = vunpack.c.l.b16 %v299
    %v1059 = vunpack.c.h.b16 %v299
    %v1060 = vunpack.c.l.b16 %v300
    %v1061 = vunpack.c.h.b16 %v300
    %v1062 = vunpack.c.l.b16 %v301
    %v1063 = vunpack.c.h.b16 %v301
    %v1064 = vunpack.c.l.b16 %v302
    %v1065 = vunpack.c.h.b16 %v302
    %v1066 = vunpack.c.l.b16 %v303
    %v1067 = vunpack.c.h.b16 %v303
    %v1068 = vunpack.c.l.b16 %v304
    %v1069 = vunpack.c.h.b16 %v304
    %v1070 = vunpack.c.l.b16 %v305
    %v1071 = vunpack.c.h.b16 %v305
    %v1072 = vunpack.c.l.b16 %v306
    %v1073 = vunpack.c.h.b16 %v306
    %v1074 = vunpack.c.l.b16 %v307
    %v1075 = vunpack.c.h.b16 %v307
    %v1076 = vunpack.c.l.b16 %v308
    %v1077 = vunpack.c.h.b16 %v308
    %v1078 = vunpack.c.l.b16 %v309
    %v1079 = vunpack.c.h.b16 %v309
    %v1080 = vunpack.c.l.b16 %v310
    %v1081 = vunpack.c.h.b16 %v310
    %v1082 = vunpack.c.l.b16 %v311
    %v1083 = vunpack.c.h.b16 %v311
    %v1084 = vunpack.c.l.b16 %v312
    %v1085 = vunpack.c.h.b16 %v312
    %v1086 = vunpack.c.l.b16 %v313
    %v1087 = vunpack.c.h.b16 %v313
    %v1088 = vunpack.c.l.b16 %v314
    %v1089 = vunpack.c.h.b16 %v314
    %v1090 = vunpack.c.l.b16 %v315
    %v1091 = vunpack.c.h.b16 %v315
    %v1092 = vunpack.c.l.b16 %v316
    %v1093 = vunpack.c.h.b16 %v316
    %v1094 = vunpack.c.l.b16 %v317
    %v1095 = vunpack.c.h.b16 %v317
    %v1096 = vunpack.c.l.b16 %v318
    %v1097 = vunpack.c.h.b16 %v318
    %v1098 = vunpack.c.l.b16 %v319
    %v1099 = vunpack.c.h.b16 %v319
    %v1100 = vunpack.c.l.b16 %v320
    %v1101 = vunpack.c.h.b16 %v320
    %v1102 = vunpack.c.l.b16 %v321
    %v1103 = vunpack.c.h.b16 %v321
    %v1104 = vunpack.c.l.b16 %v322
    %v1105 = vunpack.c.h.b16 %v322
    %v1106 = vunpack.c.l.b16 %v323
    %v1107 = vunpack.c.h.b16 %v323
    %v1108 = vunpack.c.l.b16 %v324
    %v1109 = vunpack.c.h.b16 %v324
    %v1110 = vunpack.c.l.b16 %v325
    %v1111 = vunpack.c.h.b16 %v325
    %v1112 = vunpack.c.l.b16 %v326
    %v1113 = vunpack.c.h.b16 %v326
    %v1114 = vunpack.c.l.b16 %v327
    %v1115 = vunpack.c.h.b16 %v327
    %v1116 = vunpack.c.l.b16 %v328
    %v1117 = vunpack.c.h.b16 %v328
    %v1118 = vpack.c.b16 %v610, %v606
    %v1119 = vpack.c.b16 %v611, %v607
    %v1120 = vpack.c.b16 %v612, %v608
    %v1121 = vpack.c.b16 %v613, %v609
    %v1122 = vpack.c.b16 %v618, %v614
    %v1123 = vpack.c.b16 %v619, %v615
    %v1124 = vpack.c.b16 %v620, %v616
    %v1125 = vpack.c.b16 %v621, %v617
    %v1126 = vpack.c.b16 %v626, %v622
    %v1127 = vpack.c.b16 %v627, %v623
    %v1128 = vpack.c.b16 %v628, %v624
    %v1129 = vpack.c.b16 %v629, %v625
    %v1130 = vpack.c.b16 %v634, %v630
    %v1131 = vpack.c.b16 %v635, %v631
    %v1132 = vpack.c.b16 %v636, %v632
    %v1133 = vpack.c.b16 %v637, %v633
    %v1134 = vpack.c.b16 %v642, %v638
    %v1135 = vpack.c.b16 %v643, %v639
    %v1136 = vpack.c.b16 %v644, %v640
    %v1137 = vpack.c.b16 %v645, %v641
    %v1138 = vpack.c.b16 %v650, %v646
    %v1139 = vpack.c.b16 %v651, %v647
    %v1140 = vpack.c.b16 %v652, %v648
    %v1141 = vpack.c.b16 %v653, %v649
    %v1142 = vpack.c.b16 %v658, %v654
    %v1143 = vpack.c.b16 %v659, %v655
    %v1144 = vpack.c.b16 %v660, %v656
    %v1145 = vpack.c.b16 %v661, %v657
    %v1146 = vpack.c.b16 %v666, %v662
    %v1147 = vpack.c.b16 %v667, %v663
    %v1148 = vpack.c.b16 %v668, %v664
    %v1149 = vpack.c.b16 %v669, %v665
    %v1150 = vpack.c.b16 %v674, %v670
    %v1151 = vpack.c.b16 %v675, %v671
    %v1152 = vpack.c.b16 %v676, %v672
    %v1153 = vpack.c.b16 %v677, %v673
    %v1154 = vpack.c.b16 %v682, %v678
    %v1155 = vpack.c.b16 %v683, %v679
    %v1156 = vpack.c.b16 %v684, %v680
    %v1157 = vpack.c.b16 %v685, %v681
    %v1158 = vpack.c.b16 %v690, %v686
    %v1159 = vpack.c.b16 %v691, %v687
    %v1160 = vpack.c.b16 %v692, %v688
    %v1161 = vpack.c.b16 %v693, %v689
    %v1162 = vpack.c.b16 %v698, %v694
    %v1163 = vpack.c.b16 %v699, %v695
    %v1164 = vpack.c.b16 %v700, %v696
    %v1165 = vpack.c.b16 %v701, %v697
    %v1166 = vpack.c.b16 %v706, %v702
    %v1167 = vpack.c.b16 %v707, %v703
    %v1168 = vpack.c.b16 %v708, %v704
    %v1169 = vpack.c.b16 %v709, %v705
    %v1170 = vpack.c.b16 %v714, %v710
    %v1171 = vpack.c.b16 %v715, %v711
    %v1172 = vpack.c.b16 %v716, %v712
    %v1173 = vpack.c.b16 %v717, %v713
    %v1174 = vpack.c.b16 %v722, %v718
    %v1175 = vpack.c.b16 %v723, %v719
    %v1176 = vpack.c.b16 %v724, %v720
    %v1177 = vpack.c.b16 %v725, %v721
    %v1178 = vpack.c.b16 %v730, %v726
    %v1179 = vpack.c.b16 %v731, %v727
    %v1180 = vpack.c.b16 %v732, %v728
    %v1181 = vpack.c.b16 %v733, %v729
    %v1182 = vpack.c.b16 %v738, %v734
    %v1183 = vpack.c.b16 %v739, %v735
    %v1184 = vpack.c.b16 %v740, %v736
    %v1185 = vpack.c.b16 %v741, %v737
    %v1186 = vpack.c.b16 %v746, %v742
    %v1187 = vpack.c.b16 %v747, %v743
    %v1188 = vpack.c.b16 %v748, %v744
    %v1189 = vpack.c.b16 %v749, %v745
    %v1190 = vpack.c.b16 %v754, %v750
    %v1191 = vpack.c.b16 %v755, %v751
    %v1192 = vpack.c.b16 %v756, %v752
    %v1193 = vpack.c.b16 %v757, %v753
    %v1194 = vpack.c.b16 %v762, %v758
    %v1195 = vpack.c.b16 %v763, %v759
    %v1196 = vpack.c.b16 %v764, %v760
    %v1197 = vpack.c.b16 %v765, %v761
    %v1198 = vpack.c.b16 %v770, %v766
    %v1199 = vpack.c.b16 %v771, %v767
    %v1200 = vpack.c.b16 %v772, %v768
    %v1201 = vpack.c.b16 %v773, %v769
    %v1202 = vpack.c.b16 %v778, %v774
    %v1203 = vpack.c.b16 %v779, %v775
    %v1204 = vpack.c.b16 %v780, %v776
    %v1205 = vpack.c.b16 %v781, %v777
    %v1206 = vpack.c.b16 %v786, %v782
    %v1207 = vpack.c.b16 %v787, %v783
    %v1208 = vpack.c.b16 %v788, %v784
    %v1209 = vpack.c.b16 %v789, %v785
    %v1210 = vpack.c.b16 %v794, %v790
    %v1211 = vpack.c.b16 %v795, %v791
    %v1212 = vpack.c.b16 %v796, %v792
    %v1213 = vpack.c.b16 %v797, %v793
    %v1214 = vpack.c.b16 %v802, %v798
    %v1215 = vpack.c.b16 %v803, %v799
    %v1216 = vpack.c.b16 %v804, %v800
    %v1217 = vpack.c.b16 %v805, %v801
    %v1218 = vpack.c.b16 %v810, %v806
    %v1219 = vpack.c.b16 %v811, %v807
    %v1220 = vpack.c.b16 %v812, %v808
    %v1221 = vpack.c.b16 %v813, %v809
    %v1222 = vpack.c.b16 %v818, %v814
    %v1223 = vpack.c.b16 %v819, %v815
    %v1224 = vpack.c.b16 %v820, %v816
    %v1225 = vpack.c.b16 %v821, %v817
    %v1226 = vpack.c.b16 %v826, %v822
    %v1227 = vpack.c.b16 %v827, %v823
    %v1228 = vpack.c.b16 %v828, %v824
    %v1229 = vpack.c.b16 %v829, %v825
    %v1230 = vpack.c.b16 %v834, %v830
    %v1231 = vpack.c.b16 %v835, %v831
    %v1232 = vpack.c.b16 %v836, %v832
    %v1233 = vpack.c.b16 %v837, %v833
    %v1234 = vpack.c.b16 %v842, %v838
    %v1235 = vpack.c.b16 %v843, %v839
    %v1236 = vpack.c.b16 %v844, %v840
    %v1237 = vpack.c.b16 %v845, %v841
    %v1238 = vpack.c.b16 %v850, %v846
    %v1239 = vpack.c.b16 %v851, %v847
    %v1240 = vpack.c.b16 %v852, %v848
    %v1241 = vpack.c.b16 %v853, %v849
    %v1242 = vpack.c.b16 %v858, %v854
    %v1243 = vpack.c.b16 %v859, %v855
    %v1244 = vpack.c.b16 %v860, %v856
    %v1245 = vpack.c.b16 %v861, %v857
    %v1246 = vpack.c.b16 %v866, %v862
    %v1247 = vpack.c.b16 %v867, %v863
    %v1248 = vpack.c.b16 %v868, %v864
    %v1249 = vpack.c.b16 %v869, %v865
    %v1250 = vpack.c.b16 %v874, %v870
    %v1251 = vpack.c.b16 %v875, %v871
    %v1252 = vpack.c.b16 %v876, %v872
    %v1253 = vpack.c.b16 %v877, %v873
    %v1254 = vpack.c.b16 %v882, %v878
    %v1255 = vpack.c.b16 %v883, %v879
    %v1256 = vpack.c.b16 %v884, %v880
    %v1257 = vpack.c.b16 %v885, %v881
    %v1258 = vpack.c.b16 %v890, %v886
    %v1259 = vpack.c.b16 %v891, %v887
    %v1260 = vpack.c.b16 %v892, %v888
    %v1261 = vpack.c.b16 %v893, %v889
    %v1262 = vpack.c.b16 %v898, %v894
    %v1263 = vpack.c.b16 %v899, %v895
    %v1264 = vpack.c.b16 %v900, %v896
    %v1265 = vpack.c.b16 %v901, %v897
    %v1266 = vpack.c.b16 %v906, %v902
    %v1267 = vpack.c.b16 %v907, %v903
    %v1268 = vpack.c.b16 %v908, %v904
    %v1269 = vpack.c.b16 %v909, %v905
    %v1270 = vpack.c.b16 %v914, %v910
    %v1271 = vpack.c.b16 %v915, %v911
    %v1272 = vpack.c.b16 %v916, %v912
    %v1273 = vpack.c.b16 %v917, %v913
    %v1274 = vpack.c.b16 %v922, %v918
    %v1275 = vpack.c.b16 %v923, %v919
    %v1276 = vpack.c.b16 %v924, %v920
    %v1277 = vpack.c.b16 %v925, %v921
    %v1278 = vpack.c.b16 %v930, %v926
    %v1279 = vpack.c.b16 %v931, %v927
    %v1280 = vpack.c.b16 %v932, %v928
    %v1281 = vpack.c.b16 %v933, %v929
    %v1282 = vpack.c.b16 %v938, %v934
    %v1283 = vpack.c.b16 %v939, %v935
    %v1284 = vpack.c.b16 %v940, %v936
    %v1285 = vpack.c.b16 %v941, %v937
    %v1286 = vpack.c.b16 %v946, %v942
    %v1287 = vpack.c.b16 %v947, %v943
    %v1288 = vpack.c.b16 %v948, %v944
    %v1289 = vpack.c.b16 %v949, %v945
    %v1290 = vpack.c.b16 %v954, %v950
    %v1291 = vpack.c.b16 %v955, %v951
    %v1292 = vpack.c.b16 %v956, %v952
    %v1293 = vpack.c.b16 %v957, %v953
    %v1294 = vpack.c.b16 %v962, %v958
    %v1295 = vpack.c.b16 %v963, %v959
    %v1296 = vpack.c.b16 %v964, %v960
    %v1297 = vpack.c.b16 %v965, %v961
    %v1298 = vpack.c.b16 %v970, %v966
    %v1299 = vpack.c.b16 %v971, %v967
    %v1300 = vpack.c.b16 %v972, %v968
    %v1301 = vpack.c.b16 %v973, %v969
    %v1302 = vpack.c.b16 %v978, %v974
    %v1303 = vpack.c.b16 %v979, %v975
    %v1304 = vpack.c.b16 %v980, %v976
    %v1305 = vpack.c.b16 %v981, %v977
    %v1306 = vpack.c.b16 %v986, %v982
    %v1307 = vpack.c.b16 %v987, %v983
    %v1308 = vpack.c.b16 %v988, %v984
    %v1309 = vpack.c.b16 %v989, %v985
    %v1310 = vpack.c.b16 %v994, %v990
    %v1311 = vpack.c.b16 %v995, %v991
    %v1312 = vpack.c.b16 %v996, %v992
    %v1313 = vpack.c.b16 %v997, %v993
    %v1314 = vpack.c.b16 %v1002, %v998
    %v1315 = vpack.c.b16 %v1003, %v999
    %v1316 = vpack.c.b16 %v1004, %v1000
    %v1317 = vpack.c.b16 %v1005, %v1001
    %v1318 = vpack.c.b16 %v1010, %v1006
    %v1319 = vpack.c.b16 %v1011, %v1007
    %v1320 = vpack.c.b16 %v1012, %v1008
    %v1321 = vpack.c.b16 %v1013, %v1009
    %v1322 = vpack.c.b16 %v1018, %v1014
    %v1323 = vpack.c.b16 %v1019, %v1015
    %v1324 = vpack.c.b16 %v1020, %v1016
    %v1325 = vpack.c.b16 %v1021, %v1017
    %v1326 = vpack.c.b16 %v1026, %v1022
    %v1327 = vpack.c.b16 %v1027, %v1023
    %v1328 = vpack.c.b16 %v1028, %v1024
    %v1329 = vpack.c.b16 %v1029, %v1025
    %v1330 = vpack.c.b16 %v1034, %v1030
    %v1331 = vpack.c.b16 %v1035, %v1031
    %v1332 = vpack.c.b16 %v1036, %v1032
    %v1333 = vpack.c.b16 %v1037, %v1033
    %v1334 = vpack.c.b16 %v1042, %v1038
    %v1335 = vpack.c.b16 %v1043, %v1039
    %v1336 = vpack.c.b16 %v1044, %v1040
    %v1337 = vpack.c.b16 %v1045, %v1041
    %v1338 = vpack.c.b16 %v1050, %v1046
    %v1339 = vpack.c.b16 %v1051, %v1047
    %v1340 = vpack.c.b16 %v1052, %v1048
    %v1341 = vpack.c.b16 %v1053, %v1049
    %v1342 = vpack.c.b16 %v1058, %v1054
    %v1343 = vpack.c.b16 %v1059, %v1055
    %v1344 = vpack.c.b16 %v1060, %v1056
    %v1345 = vpack.c.b16 %v1061, %v1057
    %v1346 = vpack.c.b16 %v1066, %v1062
    %v1347 = vpack.c.b16 %v1067, %v1063
    %v1348 = vpack.c.b16 %v1068, %v1064
    %v1349 = vpack.c.b16 %v1069, %v1065
    %v1350 = vpack.c.b16 %v1074, %v1070
    %v1351 = vpack.c.b16 %v1075, %v1071
    %v1352 = vpack.c.b16 %v1076, %v1072
    %v1353 = vpack.c.b16 %v1077, %v1073
    %v1354 = vpack.c.b16 %v1082, %v1078
    %v1355 = vpack.c.b16 %v1083, %v1079
    %v1356 = vpack.c.b16 %v1084, %v1080
    %v1357 = vpack.c.b16 %v1085, %v1081
    %v1358 = vpack.c.b16 %v1090, %v1086
    %v1359 = vpack.c.b16 %v1091, %v1087
    %v1360 = vpack.c.b16 %v1092, %v1088
    %v1361 = vpack.c.b16 %v1093, %v1089
    %v1362 = vpack.c.b16 %v1098, %v1094
    %v1363 = vpack.c.b16 %v1099, %v1095
    %v1364 = vpack.c.b16 %v1100, %v1096
    %v1365 = vpack.c.b16 %v1101, %v1097
    %v1366 = vpack.c.b16 %v1106, %v1102
    %v1367 = vpack.c.b16 %v1107, %v1103
    %v1368 = vpack.c.b16 %v1108, %v1104
    %v1369 = vpack.c.b16 %v1109, %v1105
    %v1370 = vpack.c.b16 %v1114, %v1110
    %v1371 = vpack.c.b16 %v1115, %v1111
    %v1372 = vpack.c.b16 %v1116, %v1112
    %v1373 = vpack.c.b16 %v1117, %v1113
    %1630 = vmatprep.subr.bf16.mxu0 %v1119
    %1631 = vmatpush1.bf16.msra.mxu0 %v1118
    %1632 = vmatprep.subr.bf16.mxu0 %v1123
    %1633 = vmatpush1.bf16.msra.mxu0 %v1122
    %1634 = vmatprep.subr.bf16.mxu0 %v1127
    %1635 = vmatpush1.bf16.msra.mxu0 %v1126
    %1636 = vmatprep.subr.bf16.mxu0 %v1131
    %1637 = vmatpush1.bf16.msra.mxu0 %v1130
    %1638 = vmatprep.subr.bf16.mxu0 %v1135
    %1639 = vmatpush1.bf16.msra.mxu0 %v1134
    %1640 = vmatprep.subr.bf16.mxu0 %v1139
    %1641 = vmatpush1.bf16.msra.mxu0 %v1138
    %1642 = vmatprep.subr.bf16.mxu0 %v1143
    %1643 = vmatpush1.bf16.msra.mxu0 %v1142
    %1644 = vmatprep.subr.bf16.mxu0 %v1147
    %1645 = vmatpush1.bf16.msra.mxu0 %v1146
    %1646 = vmatprep.subr.bf16.mxu0 %v1151
    %1647 = vmatpush1.bf16.msra.mxu0 %v1150
    %1648 = vmatprep.subr.bf16.mxu0 %v1155
    %1649 = vmatpush1.bf16.msra.mxu0 %v1154
    %1650 = vmatprep.subr.bf16.mxu0 %v1159
    %1651 = vmatpush1.bf16.msra.mxu0 %v1158
    %1652 = vmatprep.subr.bf16.mxu0 %v1163
    %1653 = vmatpush1.bf16.msra.mxu0 %v1162
    %1654 = vmatprep.subr.bf16.mxu0 %v1167
    %1655 = vmatpush1.bf16.msra.mxu0 %v1166
    %1656 = vmatprep.subr.bf16.mxu0 %v1171
    %1657 = vmatpush1.bf16.msra.mxu0 %v1170
    %1658 = vmatprep.subr.bf16.mxu0 %v1175
    %1659 = vmatpush1.bf16.msra.mxu0 %v1174
    %1660 = vmatprep.subr.bf16.mxu0 %v1179
    %1661 = vmatpush1.bf16.msra.mxu0 %v1178
    %1662 = vmatprep.mubr.bf16.mxu0 %v66
    %1663 = vmatmul.mubr.bf16.gmra.mrb[0].mxu0 %v65
    %v1664 = vpop.f32.mrb[0].mxu0
    %v1665 = vadd.f32 %v333, %v1664
    %v1666 = vpop.f32.mrb[0].mxu0
    %v1667 = vadd.f32 %v337, %v1666
    %v1668 = vpop.f32.mrb[0].mxu0
    %v1669 = vpop.f32.mrb[0].mxu0
    %1670 = vdwg.mxu0
    %1671 = vmatprep.subr.bf16.mxu0 %v1183
    %1672 = vmatpush1.bf16.msra.mxu0 %v1182
    %1673 = vmatprep.subr.bf16.mxu0 %v1187
    %1674 = vmatpush1.bf16.msra.mxu0 %v1186
    %1675 = vmatprep.subr.bf16.mxu0 %v1191
    %1676 = vmatpush1.bf16.msra.mxu0 %v1190
    %1677 = vmatprep.subr.bf16.mxu0 %v1195
    %1678 = vmatpush1.bf16.msra.mxu0 %v1194
    %1679 = vmatprep.subr.bf16.mxu0 %v1199
    %1680 = vmatpush1.bf16.msra.mxu0 %v1198
    %1681 = vmatprep.subr.bf16.mxu0 %v1203
    %1682 = vmatpush1.bf16.msra.mxu0 %v1202
    %1683 = vmatprep.subr.bf16.mxu0 %v1207
    %1684 = vmatpush1.bf16.msra.mxu0 %v1206
    %1685 = vmatprep.subr.bf16.mxu0 %v1211
    %1686 = vmatpush1.bf16.msra.mxu0 %v1210
    %1687 = vmatprep.subr.bf16.mxu0 %v1215
    %1688 = vmatpush1.bf16.msra.mxu0 %v1214
    %1689 = vmatprep.subr.bf16.mxu0 %v1219
    %1690 = vmatpush1.bf16.msra.mxu0 %v1218
    %1691 = vmatprep.subr.bf16.mxu0 %v1223
    %1692 = vmatpush1.bf16.msra.mxu0 %v1222
    %1693 = vmatprep.subr.bf16.mxu0 %v1227
    %1694 = vmatpush1.bf16.msra.mxu0 %v1226
    %1695 = vmatprep.subr.bf16.mxu0 %v1231
    %1696 = vmatpush1.bf16.msra.mxu0 %v1230
    %1697 = vmatprep.subr.bf16.mxu0 %v1235
    %1698 = vmatpush1.bf16.msra.mxu0 %v1234
    %1699 = vmatprep.subr.bf16.mxu0 %v1239
    %1700 = vmatpush1.bf16.msra.mxu0 %v1238
    %1701 = vmatprep.subr.bf16.mxu0 %v1243
    %1702 = vmatpush1.bf16.msra.mxu0 %v1242
    %1703 = vmatprep.mubr.bf16.mxu0 %v68
    %1704 = vmatmul.mubr.bf16.gmra.mrb[0].mxu0 %v67
    %v1705 = vpop.f32.mrb[0].mxu0
    %v1706 = vadd.f32 %v1665, %v1705
    %v1707 = vpop.f32.mrb[0].mxu0
    %v1708 = vadd.f32 %v1667, %v1707
    %v1709 = vpop.f32.mrb[0].mxu0
    %v1710 = vpop.f32.mrb[0].mxu0
    %1711 = vdwg.mxu0
    %1712 = vmatprep.subr.bf16.mxu0 %v1247
    %1713 = vmatpush1.bf16.msra.mxu0 %v1246
    %1714 = vmatprep.subr.bf16.mxu0 %v1251
    %1715 = vmatpush1.bf16.msra.mxu0 %v1250
    %1716 = vmatprep.subr.bf16.mxu0 %v1255
    %1717 = vmatpush1.bf16.msra.mxu0 %v1254
    %1718 = vmatprep.subr.bf16.mxu0 %v1259
    %1719 = vmatpush1.bf16.msra.mxu0 %v1258
    %1720 = vmatprep.subr.bf16.mxu0 %v1263
    %1721 = vmatpush1.bf16.msra.mxu0 %v1262
    %1722 = vmatprep.subr.bf16.mxu0 %v1267
    %1723 = vmatpush1.bf16.msra.mxu0 %v1266
    %1724 = vmatprep.subr.bf16.mxu0 %v1271
    %1725 = vmatpush1.bf16.msra.mxu0 %v1270
    %1726 = vmatprep.subr.bf16.mxu0 %v1275
    %1727 = vmatpush1.bf16.msra.mxu0 %v1274
    %1728 = vmatprep.subr.bf16.mxu0 %v1279
    %1729 = vmatpush1.bf16.msra.mxu0 %v1278
    %1730 = vmatprep.subr.bf16.mxu0 %v1283
    %1731 = vmatpush1.bf16.msra.mxu0 %v1282
    %1732 = vmatprep.subr.bf16.mxu0 %v1287
    %1733 = vmatpush1.bf16.msra.mxu0 %v1286
    %1734 = vmatprep.subr.bf16.mxu0 %v1291
    %1735 = vmatpush1.bf16.msra.mxu0 %v1290
    %1736 = vmatprep.subr.bf16.mxu0 %v1295
    %1737 = vmatpush1.bf16.msra.mxu0 %v1294
    %1738 = vmatprep.subr.bf16.mxu0 %v1299
    %1739 = vmatpush1.bf16.msra.mxu0 %v1298
    %1740 = vmatprep.subr.bf16.mxu0 %v1303
    %1741 = vmatpush1.bf16.msra.mxu0 %v1302
    %1742 = vmatprep.subr.bf16.mxu0 %v1307
    %1743 = vmatpush1.bf16.msra.mxu0 %v1306
    %1744 = vmatprep.mubr.bf16.mxu0 %v70
    %1745 = vmatmul.mubr.bf16.gmra.mrb[0].mxu0 %v69
    %v1746 = vpop.f32.mrb[0].mxu0
    %v1747 = vadd.f32 %v1706, %v1746
    %v1748 = vpop.f32.mrb[0].mxu0
    %v1749 = vadd.f32 %v1708, %v1748
    %v1750 = vpop.f32.mrb[0].mxu0
    %v1751 = vpop.f32.mrb[0].mxu0
    %1752 = vdwg.mxu0
    %1753 = vmatprep.subr.bf16.mxu0 %v1311
    %1754 = vmatpush1.bf16.msra.mxu0 %v1310
    %1755 = vmatprep.subr.bf16.mxu0 %v1315
    %1756 = vmatpush1.bf16.msra.mxu0 %v1314
    %1757 = vmatprep.subr.bf16.mxu0 %v1319
    %1758 = vmatpush1.bf16.msra.mxu0 %v1318
    %1759 = vmatprep.subr.bf16.mxu0 %v1323
    %1760 = vmatpush1.bf16.msra.mxu0 %v1322
    %1761 = vmatprep.subr.bf16.mxu0 %v1327
    %1762 = vmatpush1.bf16.msra.mxu0 %v1326
    %1763 = vmatprep.subr.bf16.mxu0 %v1331
    %1764 = vmatpush1.bf16.msra.mxu0 %v1330
    %1765 = vmatprep.subr.bf16.mxu0 %v1335
    %1766 = vmatpush1.bf16.msra.mxu0 %v1334
    %1767 = vmatprep.subr.bf16.mxu0 %v1339
    %1768 = vmatpush1.bf16.msra.mxu0 %v1338
    %1769 = vmatprep.subr.bf16.mxu0 %v1343
    %1770 = vmatpush1.bf16.msra.mxu0 %v1342
    %1771 = vmatprep.subr.bf16.mxu0 %v1347
    %1772 = vmatpush1.bf16.msra.mxu0 %v1346
    %1773 = vmatprep.subr.bf16.mxu0 %v1351
    %1774 = vmatpush1.bf16.msra.mxu0 %v1350
    %1775 = vmatprep.subr.bf16.mxu0 %v1355
    %1776 = vmatpush1.bf16.msra.mxu0 %v1354
    %1777 = vmatprep.subr.bf16.mxu0 %v1359
    %1778 = vmatpush1.bf16.msra.mxu0 %v1358
    %1779 = vmatprep.subr.bf16.mxu0 %v1363
    %1780 = vmatpush1.bf16.msra.mxu0 %v1362
    %1781 = vmatprep.subr.bf16.mxu0 %v1367
    %1782 = vmatpush1.bf16.msra.mxu0 %v1366
    %1783 = vmatprep.subr.bf16.mxu0 %v1371
    %1784 = vmatpush1.bf16.msra.mxu0 %v1370
    %1785 = vmatprep.mubr.bf16.mxu0 %v72
    %1786 = vmatmul.mubr.bf16.gmra.mrb[0].mxu0 %v71
    %v1787 = vpop.f32.mrb[0].mxu0
    %v1788 = vadd.f32 %v1747, %v1787
    %v1789 = vpop.f32.mrb[0].mxu0
    %v1790 = vadd.f32 %v1749, %v1789
    %v1791 = vpop.f32.mrb[0].mxu0
    %v1792 = vpop.f32.mrb[0].mxu0
    %1793 = vdwg.mxu0
    %1794 = vmatprep.subr.bf16.mxu0 %v1121
    %1795 = vmatpush1.bf16.msra.mxu0 %v1120
    %1796 = vmatprep.subr.bf16.mxu0 %v1125
    %1797 = vmatpush1.bf16.msra.mxu0 %v1124
    %1798 = vmatprep.subr.bf16.mxu0 %v1129
    %1799 = vmatpush1.bf16.msra.mxu0 %v1128
    %1800 = vmatprep.subr.bf16.mxu0 %v1133
    %1801 = vmatpush1.bf16.msra.mxu0 %v1132
    %1802 = vmatprep.subr.bf16.mxu0 %v1137
    %1803 = vmatpush1.bf16.msra.mxu0 %v1136
    %1804 = vmatprep.subr.bf16.mxu0 %v1141
    %1805 = vmatpush1.bf16.msra.mxu0 %v1140
    %1806 = vmatprep.subr.bf16.mxu0 %v1145
    %1807 = vmatpush1.bf16.msra.mxu0 %v1144
    %1808 = vmatprep.subr.bf16.mxu0 %v1149
    %1809 = vmatpush1.bf16.msra.mxu0 %v1148
    %1810 = vmatprep.subr.bf16.mxu0 %v1153
    %1811 = vmatpush1.bf16.msra.mxu0 %v1152
    %1812 = vmatprep.subr.bf16.mxu0 %v1157
    %1813 = vmatpush1.bf16.msra.mxu0 %v1156
    %1814 = vmatprep.subr.bf16.mxu0 %v1161
    %1815 = vmatpush1.bf16.msra.mxu0 %v1160
    %1816 = vmatprep.subr.bf16.mxu0 %v1165
    %1817 = vmatpush1.bf16.msra.mxu0 %v1164
    %1818 = vmatprep.subr.bf16.mxu0 %v1169
    %1819 = vmatpush1.bf16.msra.mxu0 %v1168
    %1820 = vmatprep.subr.bf16.mxu0 %v1173
    %1821 = vmatpush1.bf16.msra.mxu0 %v1172
    %1822 = vmatprep.subr.bf16.mxu0 %v1177
    %1823 = vmatpush1.bf16.msra.mxu0 %v1176
    %1824 = vmatprep.subr.bf16.mxu0 %v1181
    %1825 = vmatpush1.bf16.msra.mxu0 %v1180
    %1826 = vmatprep.mubr.bf16.mxu0 %v66
    %1827 = vmatmul.mubr.bf16.gmra.mrb[0].mxu0 %v65
    %v1828 = vpop.f32.mrb[0].mxu0
    %v1829 = vadd.f32 %v341, %v1828
    %v1830 = vpop.f32.mrb[0].mxu0
    %v1831 = vadd.f32 %v345, %v1830
    %v1832 = vpop.f32.mrb[0].mxu0
    %v1833 = vpop.f32.mrb[0].mxu0
    %1834 = vdwg.mxu0
    %1835 = vmatprep.subr.bf16.mxu0 %v1185
    %1836 = vmatpush1.bf16.msra.mxu0 %v1184
    %1837 = vmatprep.subr.bf16.mxu0 %v1189
    %1838 = vmatpush1.bf16.msra.mxu0 %v1188
    %1839 = vmatprep.subr.bf16.mxu0 %v1193
    %1840 = vmatpush1.bf16.msra.mxu0 %v1192
    %1841 = vmatprep.subr.bf16.mxu0 %v1197
    %1842 = vmatpush1.bf16.msra.mxu0 %v1196
    %1843 = vmatprep.subr.bf16.mxu0 %v1201
    %1844 = vmatpush1.bf16.msra.mxu0 %v1200
    %1845 = vmatprep.subr.bf16.mxu0 %v1205
    %1846 = vmatpush1.bf16.msra.mxu0 %v1204
    %1847 = vmatprep.subr.bf16.mxu0 %v1209
    %1848 = vmatpush1.bf16.msra.mxu0 %v1208
    %1849 = vmatprep.subr.bf16.mxu0 %v1213
    %1850 = vmatpush1.bf16.msra.mxu0 %v1212
    %1851 = vmatprep.subr.bf16.mxu0 %v1217
    %1852 = vmatpush1.bf16.msra.mxu0 %v1216
    %1853 = vmatprep.subr.bf16.mxu0 %v1221
    %1854 = vmatpush1.bf16.msra.mxu0 %v1220
    %1855 = vmatprep.subr.bf16.mxu0 %v1225
    %1856 = vmatpush1.bf16.msra.mxu0 %v1224
    %1857 = vmatprep.subr.bf16.mxu0 %v1229
    %1858 = vmatpush1.bf16.msra.mxu0 %v1228
    %1859 = vmatprep.subr.bf16.mxu0 %v1233
    %1860 = vmatpush1.bf16.msra.mxu0 %v1232
    %1861 = vmatprep.subr.bf16.mxu0 %v1237
    %1862 = vmatpush1.bf16.msra.mxu0 %v1236
    %1863 = vmatprep.subr.bf16.mxu0 %v1241
    %1864 = vmatpush1.bf16.msra.mxu0 %v1240
    %1865 = vmatprep.subr.bf16.mxu0 %v1245
    %1866 = vmatpush1.bf16.msra.mxu0 %v1244
    %1867 = vmatprep.mubr.bf16.mxu0 %v68
    %1868 = vmatmul.mubr.bf16.gmra.mrb[0].mxu0 %v67
    %v1869 = vpop.f32.mrb[0].mxu0
    %v1870 = vadd.f32 %v1829, %v1869
    %v1871 = vpop.f32.mrb[0].mxu0
    %v1872 = vadd.f32 %v1831, %v1871
    %v1873 = vpop.f32.mrb[0].mxu0
    %v1874 = vpop.f32.mrb[0].mxu0
    %1875 = vdwg.mxu0
    %1876 = vmatprep.subr.bf16.mxu0 %v1249
    %1877 = vmatpush1.bf16.msra.mxu0 %v1248
    %1878 = vmatprep.subr.bf16.mxu0 %v1253
    %1879 = vmatpush1.bf16.msra.mxu0 %v1252
    %1880 = vmatprep.subr.bf16.mxu0 %v1257
    %1881 = vmatpush1.bf16.msra.mxu0 %v1256
    %1882 = vmatprep.subr.bf16.mxu0 %v1261
    %1883 = vmatpush1.bf16.msra.mxu0 %v1260
    %1884 = vmatprep.subr.bf16.mxu0 %v1265
    %1885 = vmatpush1.bf16.msra.mxu0 %v1264
    %1886 = vmatprep.subr.bf16.mxu0 %v1269
    %1887 = vmatpush1.bf16.msra.mxu0 %v1268
    %1888 = vmatprep.subr.bf16.mxu0 %v1273
    %1889 = vmatpush1.bf16.msra.mxu0 %v1272
    %1890 = vmatprep.subr.bf16.mxu0 %v1277
    %1891 = vmatpush1.bf16.msra.mxu0 %v1276
    %1892 = vmatprep.subr.bf16.mxu0 %v1281
    %1893 = vmatpush1.bf16.msra.mxu0 %v1280
    %1894 = vmatprep.subr.bf16.mxu0 %v1285
    %1895 = vmatpush1.bf16.msra.mxu0 %v1284
    %1896 = vmatprep.subr.bf16.mxu0 %v1289
    %1897 = vmatpush1.bf16.msra.mxu0 %v1288
    %1898 = vmatprep.subr.bf16.mxu0 %v1293
    %1899 = vmatpush1.bf16.msra.mxu0 %v1292
    %1900 = vmatprep.subr.bf16.mxu0 %v1297
    %1901 = vmatpush1.bf16.msra.mxu0 %v1296
    %1902 = vmatprep.subr.bf16.mxu0 %v1301
    %1903 = vmatpush1.bf16.msra.mxu0 %v1300
    %1904 = vmatprep.subr.bf16.mxu0 %v1305
    %1905 = vmatpush1.bf16.msra.mxu0 %v1304
    %1906 = vmatprep.subr.bf16.mxu0 %v1309
    %1907 = vmatpush1.bf16.msra.mxu0 %v1308
    %1908 = vmatprep.mubr.bf16.mxu0 %v70
    %1909 = vmatmul.mubr.bf16.gmra.mrb[0].mxu0 %v69
    %v1910 = vpop.f32.mrb[0].mxu0
    %v1911 = vadd.f32 %v1870, %v1910
    %v1912 = vpop.f32.mrb[0].mxu0
    %v1913 = vadd.f32 %v1872, %v1912
    %v1914 = vpop.f32.mrb[0].mxu0
    %v1915 = vpop.f32.mrb[0].mxu0
    %1916 = vdwg.mxu0
    %1917 = vmatprep.subr.bf16.mxu0 %v1313
    %1918 = vmatpush1.bf16.msra.mxu0 %v1312
    %1919 = vmatprep.subr.bf16.mxu0 %v1317
    %1920 = vmatpush1.bf16.msra.mxu0 %v1316
    %1921 = vmatprep.subr.bf16.mxu0 %v1321
    %1922 = vmatpush1.bf16.msra.mxu0 %v1320
    %1923 = vmatprep.subr.bf16.mxu0 %v1325
    %1924 = vmatpush1.bf16.msra.mxu0 %v1324
    %1925 = vmatprep.subr.bf16.mxu0 %v1329
    %1926 = vmatpush1.bf16.msra.mxu0 %v1328
    %1927 = vmatprep.subr.bf16.mxu0 %v1333
    %1928 = vmatpush1.bf16.msra.mxu0 %v1332
    %1929 = vmatprep.subr.bf16.mxu0 %v1337
    %1930 = vmatpush1.bf16.msra.mxu0 %v1336
    %1931 = vmatprep.subr.bf16.mxu0 %v1341
    %1932 = vmatpush1.bf16.msra.mxu0 %v1340
    %1933 = vmatprep.subr.bf16.mxu0 %v1345
    %1934 = vmatpush1.bf16.msra.mxu0 %v1344
    %1935 = vmatprep.subr.bf16.mxu0 %v1349
    %1936 = vmatpush1.bf16.msra.mxu0 %v1348
    %1937 = vmatprep.subr.bf16.mxu0 %v1353
    %1938 = vmatpush1.bf16.msra.mxu0 %v1352
    %1939 = vmatprep.subr.bf16.mxu0 %v1357
    %1940 = vmatpush1.bf16.msra.mxu0 %v1356
    %1941 = vmatprep.subr.bf16.mxu0 %v1361
    %1942 = vmatpush1.bf16.msra.mxu0 %v1360
    %1943 = vmatprep.subr.bf16.mxu0 %v1365
    %1944 = vmatpush1.bf16.msra.mxu0 %v1364
    %1945 = vmatprep.subr.bf16.mxu0 %v1369
    %1946 = vmatpush1.bf16.msra.mxu0 %v1368
    %1947 = vmatprep.subr.bf16.mxu0 %v1373
    %1948 = vmatpush1.bf16.msra.mxu0 %v1372
    %1949 = vmatprep.mubr.bf16.mxu0 %v72
    %1950 = vmatmul.mubr.bf16.gmra.mrb[0].mxu0 %v71
    %v1951 = vpop.f32.mrb[0].mxu0
    %v1952 = vadd.f32 %v1911, %v1951
    %v1953 = vpop.f32.mrb[0].mxu0
    %v1954 = vadd.f32 %v1913, %v1953
    %v1955 = vpop.f32.mrb[0].mxu0
    %v1956 = vpop.f32.mrb[0].mxu0
    %1957 = vdwg.mxu0
    %vm1958 = vcmp.gt.f32.partialorder %v1788, 0.0
    %vm1959 = vcmp.gt.f32.partialorder %v1790, 0.0
    %vm1960 = vcmp.gt.f32.partialorder %v1952, 0.0
    %vm1961 = vcmp.gt.f32.partialorder %v1954, 0.0
    %v1962 = vmul.f32 %v1788, 0.01
    %v1963 = vmul.f32 %v1790, 0.01
    %v1964 = vmul.f32 %v1952, 0.01
    %v1965 = vmul.f32 %v1954, 0.01
    %v1966 = vsel %vm1958, %v1788, %v1962
    %v1967 = vsel %vm1959, %v1790, %v1963
    %v1968 = vsel %vm1960, %v1952, %v1964
    %v1969 = vsel %vm1961, %v1954, %v1965
    %v1970 = vpack.c.bf16 %v1966, %v1966
    %v1971 = vpack.c.bf16 %v1967, %v1967
    %v1972 = vpack.c.bf16 %v1968, %v1968
    %v1973 = vpack.c.bf16 %v1969, %v1969
    %v1974 = vld [vmem:[#allocation4] sm:$0xff]
    %v1975 = vld [vmem:[#allocation4 + $0x8] sm:$0xff]
    %v1976 = vld [vmem:[#allocation4 + $0x10] sm:$0xff]
    %v1977 = vld [vmem:[#allocation4 + $0x18] sm:$0xff]
    %v1978 = vld [vmem:[#allocation4 + $0x20] sm:$0xff]
    %v1979 = vld [vmem:[#allocation4 + $0x28] sm:$0xff]
    %v1980 = vld [vmem:[#allocation4 + $0x30] sm:$0xff]
    %v1981 = vld [vmem:[#allocation4 + $0x38] sm:$0xff]
    %v1982 = vld [vmem:[#allocation4 + $0x40] sm:$0xff]
    %v1983 = vld [vmem:[#allocation4 + $0x48] sm:$0xff]
    %v1984 = vld [vmem:[#allocation4 + $0x50] sm:$0xff]
    %v1985 = vld [vmem:[#allocation4 + $0x58] sm:$0xff]
    %v1986 = vld [vmem:[#allocation4 + $0x60] sm:$0xff]
    %v1987 = vld [vmem:[#allocation4 + $0x68] sm:$0xff]
    %v1988 = vld [vmem:[#allocation4 + $0x70] sm:$0xff]
    %v1989 = vld [vmem:[#allocation4 + $0x78] sm:$0xff]
    %v1990 = vld [vmem:[#allocation4 + $0x80] sm:$0xff]
    %v1991 = vld [vmem:[#allocation4 + $0x88] sm:$0xff]
    %v1992 = vld [vmem:[#allocation4 + $0x90] sm:$0xff]
    %v1993 = vld [vmem:[#allocation4 + $0x98] sm:$0xff]
    %v1994 = vld [vmem:[#allocation4 + $0xa0] sm:$0xff]
    %v1995 = vld [vmem:[#allocation4 + $0xa8] sm:$0xff]
    %v1996 = vld [vmem:[#allocation4 + $0xb0] sm:$0xff]
    %v1997 = vld [vmem:[#allocation4 + $0xb8] sm:$0xff]
    %v1998 = vld [vmem:[#allocation4 + $0xc0] sm:$0xff]
    %v1999 = vld [vmem:[#allocation4 + $0xc8] sm:$0xff]
    %v2000 = vld [vmem:[#allocation4 + $0xd0] sm:$0xff]
    %v2001 = vld [vmem:[#allocation4 + $0xd8] sm:$0xff]
    %v2002 = vld [vmem:[#allocation4 + $0xe0] sm:$0xff]
    %v2003 = vld [vmem:[#allocation4 + $0xe8] sm:$0xff]
    %v2004 = vld [vmem:[#allocation4 + $0xf0] sm:$0xff]
    %v2005 = vld [vmem:[#allocation4 + $0xf8] sm:$0xff]
    %v2006 = vld [vmem:[#allocation4 + $0x100] sm:$0xff]
    %v2007 = vld [vmem:[#allocation4 + $0x108] sm:$0xff]
    %v2008 = vld [vmem:[#allocation4 + $0x110] sm:$0xff]
    %v2009 = vld [vmem:[#allocation4 + $0x118] sm:$0xff]
    %v2010 = vld [vmem:[#allocation4 + $0x120] sm:$0xff]
    %v2011 = vld [vmem:[#allocation4 + $0x128] sm:$0xff]
    %v2012 = vld [vmem:[#allocation4 + $0x130] sm:$0xff]
    %v2013 = vld [vmem:[#allocation4 + $0x138] sm:$0xff]
    %v2014 = vld [vmem:[#allocation4 + $0x140] sm:$0xff]
    %v2015 = vld [vmem:[#allocation4 + $0x148] sm:$0xff]
    %v2016 = vld [vmem:[#allocation4 + $0x150] sm:$0xff]
    %v2017 = vld [vmem:[#allocation4 + $0x158] sm:$0xff]
    %v2018 = vld [vmem:[#allocation4 + $0x160] sm:$0xff]
    %v2019 = vld [vmem:[#allocation4 + $0x168] sm:$0xff]
    %v2020 = vld [vmem:[#allocation4 + $0x170] sm:$0xff]
    %v2021 = vld [vmem:[#allocation4 + $0x178] sm:$0xff]
    %v2022 = vld [vmem:[#allocation4 + $0x180] sm:$0xff]
    %v2023 = vld [vmem:[#allocation4 + $0x188] sm:$0xff]
    %v2024 = vld [vmem:[#allocation4 + $0x190] sm:$0xff]
    %v2025 = vld [vmem:[#allocation4 + $0x198] sm:$0xff]
    %v2026 = vld [vmem:[#allocation4 + $0x1a0] sm:$0xff]
    %v2027 = vld [vmem:[#allocation4 + $0x1a8] sm:$0xff]
    %v2028 = vld [vmem:[#allocation4 + $0x1b0] sm:$0xff]
    %v2029 = vld [vmem:[#allocation4 + $0x1b8] sm:$0xff]
    %v2030 = vld [vmem:[#allocation4 + $0x1c0] sm:$0xff]
    %v2031 = vld [vmem:[#allocation4 + $0x1c8] sm:$0xff]
    %v2032 = vld [vmem:[#allocation4 + $0x1d0] sm:$0xff]
    %v2033 = vld [vmem:[#allocation4 + $0x1d8] sm:$0xff]
    %v2034 = vld [vmem:[#allocation4 + $0x1e0] sm:$0xff]
    %v2035 = vld [vmem:[#allocation4 + $0x1e8] sm:$0xff]
    %v2036 = vld [vmem:[#allocation4 + $0x1f0] sm:$0xff]
    %v2037 = vld [vmem:[#allocation4 + $0x1f8] sm:$0xff]
    %v2039 = vlaneseq
    %v2040 = vshrl.u32 %v2039, 7
    %v2041 = vsub.s32 0, %v2040
    %v2042 = vrot.slane %v54, %v2041
    %v2043 = vlaneseq
    %v2044 = vshrl.u32 %v2043, 7
    %v2045 = vsub.s32 1, %v2044
    %v2046 = vrot.slane %v54, %v2045
    %v2113 = vunpack.c.l.b16 %v1974
    %v2114 = vunpack.c.h.b16 %v1974
    %v2115 = vunpack.c.l.b16 %v1975
    %v2116 = vunpack.c.h.b16 %v1975
    %v2117 = vunpack.c.l.b16 %v1976
    %v2118 = vunpack.c.h.b16 %v1976
    %v2119 = vunpack.c.l.b16 %v1977
    %v2120 = vunpack.c.h.b16 %v1977
    %v2121 = vunpack.c.l.b16 %v1978
    %v2122 = vunpack.c.h.b16 %v1978
    %v2123 = vunpack.c.l.b16 %v1979
    %v2124 = vunpack.c.h.b16 %v1979
    %v2125 = vunpack.c.l.b16 %v1980
    %v2126 = vunpack.c.h.b16 %v1980
    %v2127 = vunpack.c.l.b16 %v1981
    %v2128 = vunpack.c.h.b16 %v1981
    %v2129 = vunpack.c.l.b16 %v1982
    %v2130 = vunpack.c.h.b16 %v1982
    %v2131 = vunpack.c.l.b16 %v1983
    %v2132 = vunpack.c.h.b16 %v1983
    %v2133 = vunpack.c.l.b16 %v1984
    %v2134 = vunpack.c.h.b16 %v1984
    %v2135 = vunpack.c.l.b16 %v1985
    %v2136 = vunpack.c.h.b16 %v1985
    %v2137 = vunpack.c.l.b16 %v1986
    %v2138 = vunpack.c.h.b16 %v1986
    %v2139 = vunpack.c.l.b16 %v1987
    %v2140 = vunpack.c.h.b16 %v1987
    %v2141 = vunpack.c.l.b16 %v1988
    %v2142 = vunpack.c.h.b16 %v1988
    %v2143 = vunpack.c.l.b16 %v1989
    %v2144 = vunpack.c.h.b16 %v1989
    %v2145 = vunpack.c.l.b16 %v1990
    %v2146 = vunpack.c.h.b16 %v1990
    %v2147 = vunpack.c.l.b16 %v1991
    %v2148 = vunpack.c.h.b16 %v1991
    %v2149 = vunpack.c.l.b16 %v1992
    %v2150 = vunpack.c.h.b16 %v1992
    %v2151 = vunpack.c.l.b16 %v1993
    %v2152 = vunpack.c.h.b16 %v1993
    %v2153 = vunpack.c.l.b16 %v1994
    %v2154 = vunpack.c.h.b16 %v1994
    %v2155 = vunpack.c.l.b16 %v1995
    %v2156 = vunpack.c.h.b16 %v1995
    %v2157 = vunpack.c.l.b16 %v1996
    %v2158 = vunpack.c.h.b16 %v1996
    %v2159 = vunpack.c.l.b16 %v1997
    %v2160 = vunpack.c.h.b16 %v1997
    %v2161 = vunpack.c.l.b16 %v1998
    %v2162 = vunpack.c.h.b16 %v1998
    %v2163 = vunpack.c.l.b16 %v1999
    %v2164 = vunpack.c.h.b16 %v1999
    %v2165 = vunpack.c.l.b16 %v2000
    %v2166 = vunpack.c.h.b16 %v2000
    %v2167 = vunpack.c.l.b16 %v2001
    %v2168 = vunpack.c.h.b16 %v2001
    %v2169 = vunpack.c.l.b16 %v2002
    %v2170 = vunpack.c.h.b16 %v2002
    %v2171 = vunpack.c.l.b16 %v2003
    %v2172 = vunpack.c.h.b16 %v2003
    %v2173 = vunpack.c.l.b16 %v2004
    %v2174 = vunpack.c.h.b16 %v2004
    %v2175 = vunpack.c.l.b16 %v2005
    %v2176 = vunpack.c.h.b16 %v2005
    %v2177 = vunpack.c.l.b16 %v2006
    %v2178 = vunpack.c.h.b16 %v2006
    %v2179 = vunpack.c.l.b16 %v2007
    %v2180 = vunpack.c.h.b16 %v2007
    %v2181 = vunpack.c.l.b16 %v2008
    %v2182 = vunpack.c.h.b16 %v2008
    %v2183 = vunpack.c.l.b16 %v2009
    %v2184 = vunpack.c.h.b16 %v2009
    %v2185 = vunpack.c.l.b16 %v2010
    %v2186 = vunpack.c.h.b16 %v2010
    %v2187 = vunpack.c.l.b16 %v2011
    %v2188 = vunpack.c.h.b16 %v2011
    %v2189 = vunpack.c.l.b16 %v2012
    %v2190 = vunpack.c.h.b16 %v2012
    %v2191 = vunpack.c.l.b16 %v2013
    %v2192 = vunpack.c.h.b16 %v2013
    %v2193 = vunpack.c.l.b16 %v2014
    %v2194 = vunpack.c.h.b16 %v2014
    %v2195 = vunpack.c.l.b16 %v2015
    %v2196 = vunpack.c.h.b16 %v2015
    %v2197 = vunpack.c.l.b16 %v2016
    %v2198 = vunpack.c.h.b16 %v2016
    %v2199 = vunpack.c.l.b16 %v2017
    %v2200 = vunpack.c.h.b16 %v2017
    %v2201 = vunpack.c.l.b16 %v2018
    %v2202 = vunpack.c.h.b16 %v2018
    %v2203 = vunpack.c.l.b16 %v2019
    %v2204 = vunpack.c.h.b16 %v2019
    %v2205 = vunpack.c.l.b16 %v2020
    %v2206 = vunpack.c.h.b16 %v2020
    %v2207 = vunpack.c.l.b16 %v2021
    %v2208 = vunpack.c.h.b16 %v2021
    %v2209 = vunpack.c.l.b16 %v2022
    %v2210 = vunpack.c.h.b16 %v2022
    %v2211 = vunpack.c.l.b16 %v2023
    %v2212 = vunpack.c.h.b16 %v2023
    %v2213 = vunpack.c.l.b16 %v2024
    %v2214 = vunpack.c.h.b16 %v2024
    %v2215 = vunpack.c.l.b16 %v2025
    %v2216 = vunpack.c.h.b16 %v2025
    %v2217 = vunpack.c.l.b16 %v2026
    %v2218 = vunpack.c.h.b16 %v2026
    %v2219 = vunpack.c.l.b16 %v2027
    %v2220 = vunpack.c.h.b16 %v2027
    %v2221 = vunpack.c.l.b16 %v2028
    %v2222 = vunpack.c.h.b16 %v2028
    %v2223 = vunpack.c.l.b16 %v2029
    %v2224 = vunpack.c.h.b16 %v2029
    %v2225 = vunpack.c.l.b16 %v2030
    %v2226 = vunpack.c.h.b16 %v2030
    %v2227 = vunpack.c.l.b16 %v2031
    %v2228 = vunpack.c.h.b16 %v2031
    %v2229 = vunpack.c.l.b16 %v2032
    %v2230 = vunpack.c.h.b16 %v2032
    %v2231 = vunpack.c.l.b16 %v2033
    %v2232 = vunpack.c.h.b16 %v2033
    %v2233 = vunpack.c.l.b16 %v2034
    %v2234 = vunpack.c.h.b16 %v2034
    %v2235 = vunpack.c.l.b16 %v2035
    %v2236 = vunpack.c.h.b16 %v2035
    %v2237 = vunpack.c.l.b16 %v2036
    %v2238 = vunpack.c.h.b16 %v2036
    %v2239 = vunpack.c.l.b16 %v2037
    %v2240 = vunpack.c.h.b16 %v2037
    %v2241 = vpack.c.b16 %v2115, %v2113
    %v2242 = vpack.c.b16 %v2116, %v2114
    %v2243 = vpack.c.b16 %v2119, %v2117
    %v2244 = vpack.c.b16 %v2120, %v2118
    %v2245 = vpack.c.b16 %v2123, %v2121
    %v2246 = vpack.c.b16 %v2124, %v2122
    %v2247 = vpack.c.b16 %v2127, %v2125
    %v2248 = vpack.c.b16 %v2128, %v2126
    %v2249 = vpack.c.b16 %v2131, %v2129
    %v2250 = vpack.c.b16 %v2132, %v2130
    %v2251 = vpack.c.b16 %v2135, %v2133
    %v2252 = vpack.c.b16 %v2136, %v2134
    %v2253 = vpack.c.b16 %v2139, %v2137
    %v2254 = vpack.c.b16 %v2140, %v2138
    %v2255 = vpack.c.b16 %v2143, %v2141
    %v2256 = vpack.c.b16 %v2144, %v2142
    %v2257 = vpack.c.b16 %v2147, %v2145
    %v2258 = vpack.c.b16 %v2148, %v2146
    %v2259 = vpack.c.b16 %v2151, %v2149
    %v2260 = vpack.c.b16 %v2152, %v2150
    %v2261 = vpack.c.b16 %v2155, %v2153
    %v2262 = vpack.c.b16 %v2156, %v2154
    %v2263 = vpack.c.b16 %v2159, %v2157
    %v2264 = vpack.c.b16 %v2160, %v2158
    %v2265 = vpack.c.b16 %v2163, %v2161
    %v2266 = vpack.c.b16 %v2164, %v2162
    %v2267 = vpack.c.b16 %v2167, %v2165
    %v2268 = vpack.c.b16 %v2168, %v2166
    %v2269 = vpack.c.b16 %v2171, %v2169
    %v2270 = vpack.c.b16 %v2172, %v2170
    %v2271 = vpack.c.b16 %v2175, %v2173
    %v2272 = vpack.c.b16 %v2176, %v2174
    %v2273 = vpack.c.b16 %v2179, %v2177
    %v2274 = vpack.c.b16 %v2180, %v2178
    %v2275 = vpack.c.b16 %v2183, %v2181
    %v2276 = vpack.c.b16 %v2184, %v2182
    %v2277 = vpack.c.b16 %v2187, %v2185
    %v2278 = vpack.c.b16 %v2188, %v2186
    %v2279 = vpack.c.b16 %v2191, %v2189
    %v2280 = vpack.c.b16 %v2192, %v2190
    %v2281 = vpack.c.b16 %v2195, %v2193
    %v2282 = vpack.c.b16 %v2196, %v2194
    %v2283 = vpack.c.b16 %v2199, %v2197
    %v2284 = vpack.c.b16 %v2200, %v2198
    %v2285 = vpack.c.b16 %v2203, %v2201
    %v2286 = vpack.c.b16 %v2204, %v2202
    %v2287 = vpack.c.b16 %v2207, %v2205
    %v2288 = vpack.c.b16 %v2208, %v2206
    %v2289 = vpack.c.b16 %v2211, %v2209
    %v2290 = vpack.c.b16 %v2212, %v2210
    %v2291 = vpack.c.b16 %v2215, %v2213
    %v2292 = vpack.c.b16 %v2216, %v2214
    %v2293 = vpack.c.b16 %v2219, %v2217
    %v2294 = vpack.c.b16 %v2220, %v2218
    %v2295 = vpack.c.b16 %v2223, %v2221
    %v2296 = vpack.c.b16 %v2224, %v2222
    %v2297 = vpack.c.b16 %v2227, %v2225
    %v2298 = vpack.c.b16 %v2228, %v2226
    %v2299 = vpack.c.b16 %v2231, %v2229
    %v2300 = vpack.c.b16 %v2232, %v2230
    %v2301 = vpack.c.b16 %v2235, %v2233
    %v2302 = vpack.c.b16 %v2236, %v2234
    %v2303 = vpack.c.b16 %v2239, %v2237
    %v2304 = vpack.c.b16 %v2240, %v2238
    %2369 = vmatprep.subr.bf16.mxu0 %v2242
    %2370 = vmatpush1.bf16.msra.mxu0 %v2241
    %2371 = vmatprep.subr.bf16.mxu0 %v2244
    %2372 = vmatpush1.bf16.msra.mxu0 %v2243
    %2373 = vmatprep.subr.bf16.mxu0 %v2246
    %2374 = vmatpush1.bf16.msra.mxu0 %v2245
    %2375 = vmatprep.subr.bf16.mxu0 %v2248
    %2376 = vmatpush1.bf16.msra.mxu0 %v2247
    %2377 = vmatprep.subr.bf16.mxu0 %v2250
    %2378 = vmatpush1.bf16.msra.mxu0 %v2249
    %2379 = vmatprep.subr.bf16.mxu0 %v2252
    %2380 = vmatpush1.bf16.msra.mxu0 %v2251
    %2381 = vmatprep.subr.bf16.mxu0 %v2254
    %2382 = vmatpush1.bf16.msra.mxu0 %v2253
    %2383 = vmatprep.subr.bf16.mxu0 %v2256
    %2384 = vmatpush1.bf16.msra.mxu0 %v2255
    %2385 = vmatprep.subr.bf16.mxu0 %v2258
    %2386 = vmatpush1.bf16.msra.mxu0 %v2257
    %2387 = vmatprep.subr.bf16.mxu0 %v2260
    %2388 = vmatpush1.bf16.msra.mxu0 %v2259
    %2389 = vmatprep.subr.bf16.mxu0 %v2262
    %2390 = vmatpush1.bf16.msra.mxu0 %v2261
    %2391 = vmatprep.subr.bf16.mxu0 %v2264
    %2392 = vmatpush1.bf16.msra.mxu0 %v2263
    %2393 = vmatprep.subr.bf16.mxu0 %v2266
    %2394 = vmatpush1.bf16.msra.mxu0 %v2265
    %2395 = vmatprep.subr.bf16.mxu0 %v2268
    %2396 = vmatpush1.bf16.msra.mxu0 %v2267
    %2397 = vmatprep.subr.bf16.mxu0 %v2270
    %2398 = vmatpush1.bf16.msra.mxu0 %v2269
    %2399 = vmatprep.subr.bf16.mxu0 %v2272
    %2400 = vmatpush1.bf16.msra.mxu0 %v2271
    %2401 = vmatprep.mubr.bf16.mxu0 %v1971
    %2402 = vmatmul.mubr.bf16.gmra.mrb[0].mxu0 %v1970
    %v2403 = vpop.f32.mrb[0].mxu0
    %v2404 = vadd.f32 %v2042, %v2403
    %v2405 = vpop.f32.mrb[0].mxu0
    %v2406 = vadd.f32 %v2046, %v2405
    %v2407 = vpop.f32.mrb[0].mxu0
    %v2408 = vpop.f32.mrb[0].mxu0
    %2409 = vdwg.mxu0
    %2410 = vmatprep.subr.bf16.mxu0 %v2274
    %2411 = vmatpush1.bf16.msra.mxu0 %v2273
    %2412 = vmatprep.subr.bf16.mxu0 %v2276
    %2413 = vmatpush1.bf16.msra.mxu0 %v2275
    %2414 = vmatprep.subr.bf16.mxu0 %v2278
    %2415 = vmatpush1.bf16.msra.mxu0 %v2277
    %2416 = vmatprep.subr.bf16.mxu0 %v2280
    %2417 = vmatpush1.bf16.msra.mxu0 %v2279
    %2418 = vmatprep.subr.bf16.mxu0 %v2282
    %2419 = vmatpush1.bf16.msra.mxu0 %v2281
    %2420 = vmatprep.subr.bf16.mxu0 %v2284
    %2421 = vmatpush1.bf16.msra.mxu0 %v2283
    %2422 = vmatprep.subr.bf16.mxu0 %v2286
    %2423 = vmatpush1.bf16.msra.mxu0 %v2285
    %2424 = vmatprep.subr.bf16.mxu0 %v2288
    %2425 = vmatpush1.bf16.msra.mxu0 %v2287
    %2426 = vmatprep.subr.bf16.mxu0 %v2290
    %2427 = vmatpush1.bf16.msra.mxu0 %v2289
    %2428 = vmatprep.subr.bf16.mxu0 %v2292
    %2429 = vmatpush1.bf16.msra.mxu0 %v2291
    %2430 = vmatprep.subr.bf16.mxu0 %v2294
    %2431 = vmatpush1.bf16.msra.mxu0 %v2293
    %2432 = vmatprep.subr.bf16.mxu0 %v2296
    %2433 = vmatpush1.bf16.msra.mxu0 %v2295
    %2434 = vmatprep.subr.bf16.mxu0 %v2298
    %2435 = vmatpush1.bf16.msra.mxu0 %v2297
    %2436 = vmatprep.subr.bf16.mxu0 %v2300
    %2437 = vmatpush1.bf16.msra.mxu0 %v2299
    %2438 = vmatprep.subr.bf16.mxu0 %v2302
    %2439 = vmatpush1.bf16.msra.mxu0 %v2301
    %2440 = vmatprep.subr.bf16.mxu0 %v2304
    %2441 = vmatpush1.bf16.msra.mxu0 %v2303
    %2442 = vmatprep.mubr.bf16.mxu0 %v1973
    %2443 = vmatmul.mubr.bf16.gmra.mrb[0].mxu0 %v1972
    %v2444 = vpop.f32.mrb[0].mxu0
    %v2445 = vadd.f32 %v2404, %v2444
    %v2446 = vpop.f32.mrb[0].mxu0
    %v2447 = vadd.f32 %v2406, %v2446
    %v2448 = vpop.f32.mrb[0].mxu0
    %v2449 = vpop.f32.mrb[0].mxu0
    %2450 = vdwg.mxu0
    %v2451 = vpack.c.bf16 %v2445, %v2445
    %v2452 = vpack.c.bf16 %v2447, %v2447
    %v2453 = vld [vmem:[%s3] sm:$0xf]
    %v2454 = vld [vmem:[%s3 + $0x4] sm:$0xf]
    %v2455 = vld [vmem:[%s3 + $0x8] sm:$0xf]
    %v2456 = vld [vmem:[%s3 + $0xc] sm:$0xf]
    %v2457 = vld [vmem:[%s3 + $0x10] sm:$0xf]
    %v2458 = vld [vmem:[%s3 + $0x14] sm:$0xf]
    %v2459 = vld [vmem:[%s3 + $0x18] sm:$0xf]
    %v2460 = vld [vmem:[%s3 + $0x1c] sm:$0xf]
    %v2461 = vld [vmem:[%s3 + $0x20] sm:$0xf]
    %v2462 = vld [vmem:[%s3 + $0x24] sm:$0xf]
    %v2463 = vld [vmem:[%s3 + $0x28] sm:$0xf]
    %v2464 = vld [vmem:[%s3 + $0x2c] sm:$0xf]
    %v2465 = vld [vmem:[%s3 + $0x30] sm:$0xf]
    %v2466 = vld [vmem:[%s3 + $0x34] sm:$0xf]
    %v2467 = vld [vmem:[%s3 + $0x38] sm:$0xf]
    %v2468 = vld [vmem:[%s3 + $0x3c] sm:$0xf]
    %v2469 = vld [vmem:[%s3 + $0x40] sm:$0xf]
    %v2470 = vld [vmem:[%s3 + $0x44] sm:$0xf]
    %v2471 = vld [vmem:[%s3 + $0x48] sm:$0xf]
    %v2472 = vld [vmem:[%s3 + $0x4c] sm:$0xf]
    %v2473 = vld [vmem:[%s3 + $0x50] sm:$0xf]
    %v2474 = vld [vmem:[%s3 + $0x54] sm:$0xf]
    %v2475 = vld [vmem:[%s3 + $0x58] sm:$0xf]
    %v2476 = vld [vmem:[%s3 + $0x5c] sm:$0xf]
    %v2477 = vld [vmem:[%s3 + $0x60] sm:$0xf]
    %v2478 = vld [vmem:[%s3 + $0x64] sm:$0xf]
    %v2479 = vld [vmem:[%s3 + $0x68] sm:$0xf]
    %v2480 = vld [vmem:[%s3 + $0x6c] sm:$0xf]
    %v2481 = vld [vmem:[%s3 + $0x70] sm:$0xf]
    %v2482 = vld [vmem:[%s3 + $0x74] sm:$0xf]
    %v2483 = vld [vmem:[%s3 + $0x78] sm:$0xf]
    %v2484 = vld [vmem:[%s3 + $0x7c] sm:$0xf]
    %v2485 = vlaneseq
    %v2486 = vshrl.u32 %v2485, 7
    %v2487 = vsub.s32 0, %v2486
    %v2488 = vrot.slane %v55, %v2487
    %v2521 = vunpack.c.l.b16 %v2453
    %v2522 = vunpack.c.l.b16 %v2454
    %v2523 = vunpack.c.l.b16 %v2455
    %v2524 = vunpack.c.l.b16 %v2456
    %v2525 = vunpack.c.l.b16 %v2457
    %v2526 = vunpack.c.l.b16 %v2458
    %v2527 = vunpack.c.l.b16 %v2459
    %v2528 = vunpack.c.l.b16 %v2460
    %v2529 = vunpack.c.l.b16 %v2461
    %v2530 = vunpack.c.l.b16 %v2462
    %v2531 = vunpack.c.l.b16 %v2463
    %v2532 = vunpack.c.l.b16 %v2464
    %v2533 = vunpack.c.l.b16 %v2465
    %v2534 = vunpack.c.l.b16 %v2466
    %v2535 = vunpack.c.l.b16 %v2467
    %v2536 = vunpack.c.l.b16 %v2468
    %v2537 = vunpack.c.l.b16 %v2469
    %v2538 = vunpack.c.l.b16 %v2470
    %v2539 = vunpack.c.l.b16 %v2471
    %v2540 = vunpack.c.l.b16 %v2472
    %v2541 = vunpack.c.l.b16 %v2473
    %v2542 = vunpack.c.l.b16 %v2474
    %v2543 = vunpack.c.l.b16 %v2475
    %v2544 = vunpack.c.l.b16 %v2476
    %v2545 = vunpack.c.l.b16 %v2477
    %v2546 = vunpack.c.l.b16 %v2478
    %v2547 = vunpack.c.l.b16 %v2479
    %v2548 = vunpack.c.l.b16 %v2480
    %v2549 = vunpack.c.l.b16 %v2481
    %v2550 = vunpack.c.l.b16 %v2482
    %v2551 = vunpack.c.l.b16 %v2483
    %v2552 = vunpack.c.l.b16 %v2484
    %v2553 = vpack.c.b16 %v2522, %v2521
    %v2554 = vpack.c.b16 %v2524, %v2523
    %v2555 = vpack.c.b16 %v2526, %v2525
    %v2556 = vpack.c.b16 %v2528, %v2527
    %v2557 = vpack.c.b16 %v2530, %v2529
    %v2558 = vpack.c.b16 %v2532, %v2531
    %v2559 = vpack.c.b16 %v2534, %v2533
    %v2560 = vpack.c.b16 %v2536, %v2535
    %v2561 = vpack.c.b16 %v2538, %v2537
    %v2562 = vpack.c.b16 %v2540, %v2539
    %v2563 = vpack.c.b16 %v2542, %v2541
    %v2564 = vpack.c.b16 %v2544, %v2543
    %v2565 = vpack.c.b16 %v2546, %v2545
    %v2566 = vpack.c.b16 %v2548, %v2547
    %v2567 = vpack.c.b16 %v2550, %v2549
    %v2568 = vpack.c.b16 %v2552, %v2551
    %2585 = vmatprep.subr.bf16.mxu0 0
    %2586 = vmatpush1.bf16.msra.mxu0 %v2553
    %2587 = vmatprep.subr.bf16.mxu0 0
    %2588 = vmatpush1.bf16.msra.mxu0 %v2554
    %2589 = vmatprep.subr.bf16.mxu0 0
    %2590 = vmatpush1.bf16.msra.mxu0 %v2555
    %2591 = vmatprep.subr.bf16.mxu0 0
    %2592 = vmatpush1.bf16.msra.mxu0 %v2556
    %2593 = vmatprep.subr.bf16.mxu0 0
    %2594 = vmatpush1.bf16.msra.mxu0 %v2557
    %2595 = vmatprep.subr.bf16.mxu0 0
    %2596 = vmatpush1.bf16.msra.mxu0 %v2558
    %2597 = vmatprep.subr.bf16.mxu0 0
    %2598 = vmatpush1.bf16.msra.mxu0 %v2559
    %2599 = vmatprep.subr.bf16.mxu0 0
    %2600 = vmatpush1.bf16.msra.mxu0 %v2560
    %2601 = vmatprep.subr.bf16.mxu0 0
    %2602 = vmatpush1.bf16.msra.mxu0 %v2561
    %2603 = vmatprep.subr.bf16.mxu0 0
    %2604 = vmatpush1.bf16.msra.mxu0 %v2562
    %2605 = vmatprep.subr.bf16.mxu0 0
    %2606 = vmatpush1.bf16.msra.mxu0 %v2563
    %2607 = vmatprep.subr.bf16.mxu0 0
    %2608 = vmatpush1.bf16.msra.mxu0 %v2564
    %2609 = vmatprep.subr.bf16.mxu0 0
    %2610 = vmatpush1.bf16.msra.mxu0 %v2565
    %2611 = vmatprep.subr.bf16.mxu0 0
    %2612 = vmatpush1.bf16.msra.mxu0 %v2566
    %2613 = vmatprep.subr.bf16.mxu0 0
    %2614 = vmatpush1.bf16.msra.mxu0 %v2567
    %2615 = vmatprep.subr.bf16.mxu0 0
    %2616 = vmatpush1.bf16.msra.mxu0 %v2568
    %2617 = vmatprep.mubr.bf16.mxu0 %v2452
    %2618 = vmatmul.mubr.bf16.gmra.mrb[0].mxu0 %v2451
    %v2619 = vpop.f32.mrb[0].mxu0
    %v2620 = vadd.f32 %v2488, %v2619
    %v2621 = vpop.f32.mrb[0].mxu0
    %v2622 = vpop.f32.mrb[0].mxu0
    %v2623 = vpop.f32.mrb[0].mxu0
    %2624 = vdwg.mxu0
    %vm2625 = vcmp.gt.f32.partialorder %v2620, 0.0
    %v2626 = vmul.f32 %v2620, 0.01
    %v2627 = vsel %vm2625, %v2620, %v2626
    %v2628 = vpack.c.bf16 %v2627, %v2627
    %v2629 = vld [vmem:[%s4] sm:$0xf]
    %v2630 = vld [vmem:[%s4 + $0x4] sm:$0xf]
    %v2631 = vld [vmem:[%s4 + $0x8] sm:$0xf]
    %v2632 = vld [vmem:[%s4 + $0xc] sm:$0xf]
    %v2633 = vld [vmem:[%s4 + $0x10] sm:$0xf]
    %v2634 = vld [vmem:[%s4 + $0x14] sm:$0xf]
    %v2635 = vld [vmem:[%s4 + $0x18] sm:$0xf]
    %v2636 = vld [vmem:[%s4 + $0x1c] sm:$0xf]
    %v2637 = vlaneseq
    %v2638 = vshrl.u32 %v2637, 7
    %v2639 = vsub.s32 0, %v2638
    %v2640 = vrot.slane %v56, %v2639
    %v2649 = vunpack.c.l.b16 %v2629
    %v2650 = vunpack.c.l.b16 %v2630
    %v2651 = vunpack.c.l.b16 %v2631
    %v2652 = vunpack.c.l.b16 %v2632
    %v2653 = vunpack.c.l.b16 %v2633
    %v2654 = vunpack.c.l.b16 %v2634
    %v2655 = vunpack.c.l.b16 %v2635
    %v2656 = vunpack.c.l.b16 %v2636
    %v2657 = vpack.c.b16 %v2650, %v2649
    %v2658 = vpack.c.b16 %v2652, %v2651
    %v2659 = vpack.c.b16 %v2654, %v2653
    %v2660 = vpack.c.b16 %v2656, %v2655
    %vm2665 = vcmask 523264
    %v2667 = vsel %vm2665, %v2628, 0
    %2669 = vmatprep.subr.bf16.mxu0 0
    %2670 = vmatpush1.bf16.msra.mxu0 %v2657
    %2671 = vmatprep.subr.bf16.mxu0 0
    %2672 = vmatpush1.bf16.msra.mxu0 %v2658
    %2673 = vmatprep.subr.bf16.mxu0 0
    %2674 = vmatpush1.bf16.msra.mxu0 %v2659
    %2675 = vmatprep.subr.bf16.mxu0 0
    %2676 = vmatpush1.bf16.msra.mxu0 %v2660
    %2677 = vmatprep.subr.bf16.mxu0 0
    %2678 = vmatpush1.bf16.msra.mxu0 0
    %2679 = vmatprep.subr.bf16.mxu0 0
    %2680 = vmatpush1.bf16.msra.mxu0 0
    %2681 = vmatprep.subr.bf16.mxu0 0
    %2682 = vmatpush1.bf16.msra.mxu0 0
    %2683 = vmatprep.subr.bf16.mxu0 0
    %2684 = vmatpush1.bf16.msra.mxu0 0
    %2685 = vmatprep.subr.bf16.mxu0 0
    %2686 = vmatpush1.bf16.msra.mxu0 0
    %2687 = vmatprep.subr.bf16.mxu0 0
    %2688 = vmatpush1.bf16.msra.mxu0 0
    %2689 = vmatprep.subr.bf16.mxu0 0
    %2690 = vmatpush1.bf16.msra.mxu0 0
    %2691 = vmatprep.subr.bf16.mxu0 0
    %2692 = vmatpush1.bf16.msra.mxu0 0
    %2693 = vmatprep.subr.bf16.mxu0 0
    %2694 = vmatpush1.bf16.msra.mxu0 0
    %2695 = vmatprep.subr.bf16.mxu0 0
    %2696 = vmatpush1.bf16.msra.mxu0 0
    %2697 = vmatprep.subr.bf16.mxu0 0
    %2698 = vmatpush1.bf16.msra.mxu0 0
    %2699 = vmatprep.subr.bf16.mxu0 0
    %2700 = vmatpush1.bf16.msra.mxu0 0
    %2701 = vmatprep.mubr.bf16.mxu0 0
    %2702 = vmatmul.mubr.bf16.gmra.mrb[0].mxu0 %v2667
    %v2703 = vpop.f32.mrb[0].mxu0
    %v2704 = vadd.f32 %v2640, %v2703
    %v2705 = vpop.f32.mrb[0].mxu0
    %v2706 = vpop.f32.mrb[0].mxu0
    %v2707 = vpop.f32.mrb[0].mxu0
    %2708 = vdwg.mxu0
    %vm2709 = vcmask 23552
    %2710 = vst.msk [vmem:[%s6] sm:$0xff] %vm2709, %v2704
    // Predicated region
    $region34: #{tpu_custom_call.1} parent=1 // pred_check
      _
    $region35: #{tpu_custom_call.1} parent=1 // pred_check_branch
      %2712 = sbr.rel (0) target = $region37
    $region36: #{tpu_custom_call.1} parent=1 // pred_region
      _
    $region37: #{tpu_custom_call.1} parent=1 // pred_fallthru
      _
    // Predicated region
    $region38: #{tpu_custom_call.1} parent=1 // pred_check
      _
    $region39: #{tpu_custom_call.1} parent=1 // pred_check_branch
      %2714 = sbr.rel (0) target = $region41
    $region40: #{tpu_custom_call.1} parent=1 // pred_region
      _
    $region41: #{tpu_custom_call.1} parent=1 // pred_fallthru
      _
    %2715 = vsyncpa [#allocation3], 1
    %2716 = vsyncpa [#allocation5], 1

</llo_original>
